<compile_context>
chip_gen: v7x
topology: tpu7x:2x2x1
jax: 0.10.0
libtpu: 0.0.40
codegen_flags: <defaults>
</compile_context>

<pallas_src>
import functools

import jax
import jax.numpy as jnp
from jax import lax
from jax.experimental import pallas as pl
from jax.experimental.pallas import tpu as pltpu

_LN_EPS = 1e-5            # nn.LayerNorm default
_TIME_UNROLL_LIMIT = 32   # fully unroll the time loop up to this length, fori_loop beyond


# ---------------------------------------------------------------------------
# Generation-aware sizing helpers (host-side, trace time only)
# ---------------------------------------------------------------------------
def _vmem_capacity_bytes():
    try:
        info = pltpu.get_tpu_info()
        for attr in ("vmem_capacity_bytes", "vmem_bytes", "vmem_size_bytes"):
            v = getattr(info, attr, None)
            if v:
                return int(v)
    except Exception:
        pass
    return 64 * 1024 * 1024      # conservative fallback (v7x-sized)


def _vmem_budget_bytes():
    # ~75% of physical VMEM: ~48 MiB on v7x, ~96 MiB on v5e/v6e.
    return max(32 * 1024 * 1024, (_vmem_capacity_bytes() * 3) // 4)


def _num_tensorcores():
    try:
        info = pltpu.get_tpu_info()
        for attr in ("num_tensorcores", "tensorcores_per_chip", "core_count"):
            v = getattr(info, attr, None)
            if v:
                return max(1, int(v))
    except Exception:
        pass
    try:
        if "v7" in jax.devices()[0].device_kind.lower():
            return 2
    except Exception:
        pass
    return 1


def _choose_batch_block(batch, seq_len, hidden_dims, p0_cols):
    """Pick the batch block: full batch on single-TC chips, batch/num_cores on v7x, capped by VMEM."""
    ncores = _num_tensorcores()
    bb = batch
    if ncores > 1 and batch % ncores == 0 and (batch // ncores) % 8 == 0:
        bb = batch // ncores                         # shard batch blocks across TensorCores

    budget = _vmem_budget_bytes()

    def vmem_est(b):
        rows = seq_len * b
        total = 2 * rows * p0_cols * 4               # x0 block (double-buffered, f32)
        for l in range(1, len(hidden_dims)):
            total += rows * hidden_dims[l - 1] * 2   # inter-layer y scratch (bf16)
            total += rows * 3 * hidden_dims[l] * 4   # staged xproj scratch (f32)
        return total

    # Halve the block only while the estimate blows the budget and (8,128) tiling stays legal.
    while vmem_est(bb) > budget and bb % 16 == 0 and bb > 8:
        bb //= 2
    return bb, batch // bb


def _full_spec(a):
    return pl.BlockSpec(a.shape, lambda i: (0,) * a.ndim)


# ---------------------------------------------------------------------------
# GRU recurrence (PyTorch nn.GRU gate equations, gate weights fused r|z|n)
# ---------------------------------------------------------------------------
def _gru_recurrence(xp_ref, wh_ref, bh_ref, bin_ref, y_ref, *, seq_len, bb, h_dim):
    """One layer's recurrence for one batch block.  xp_ref holds the hoisted input projection
    (T*bb, 3H); y_ref (optional, VMEM scratch) receives the per-step hidden states; returns h_T."""
    wh = wh_ref[...]                                               # (H, 3H) bf16, loaded once
    bh = jnp.broadcast_to(bh_ref[...], (bb, 3 * h_dim))           # hoisted broadcast
    bin_b = (jnp.broadcast_to(bin_ref[...], (bb, h_dim))
             if bin_ref is not None else None)                    # n-gate input bias (layers >= 1)

    def step(t, h):
        start = t * bb
        if not isinstance(t, int):
            start = pl.multiple_of(start, bb)
        xp = xp_ref[pl.ds(start, bb), :].astype(jnp.float32)      # (bb, 3H)
        hp = jnp.dot(h.astype(jnp.bfloat16), wh,
                     preferred_element_type=jnp.float32) + bh     # (bb, 3H)
        r = jax.nn.sigmoid(xp[:, :h_dim] + hp[:, :h_dim])
        z = jax.nn.sigmoid(xp[:, h_dim:2 * h_dim] + hp[:, h_dim:2 * h_dim])
        n_in = xp[:, 2 * h_dim:]
        if bin_b is not None:
            n_in = n_in + bin_b
        n = jnp.tanh(n_in + r * hp[:, 2 * h_dim:])
        h_new = (1.0 - z) * n + z * h
        if y_ref is not None:
            y_ref[pl.ds(start, bb), :] = h_new.astype(y_ref.dtype)
        return h_new

    h0 = jnp.zeros((bb, h_dim), jnp.float32)
    if seq_len <= _TIME_UNROLL_LIMIT:
        h = h0
        for t in range(seq_len):                                   # static unroll: h lives in vregs
            h = step(t, h)
    else:
        h = lax.fori_loop(0, seq_len, step, h0, unroll=4)          # bounded unroll for long seqs
    return h


# ---------------------------------------------------------------------------
# Fully fused Encoder kernel: all GRU layers + LayerNorm + mu/log_var head
# ---------------------------------------------------------------------------
def _encoder_kernel(*refs, seq_len, batch_block, hidden_dims, n_layers):
    it = iter(refs)
    x0_ref = next(it)                                              # (T*bb, 3*H0): layer-0 xproj
    layers = []
    for l in range(n_layers):
        if l == 0:
            layers.append((None, None, next(it), next(it)))        # (wi, bin, wh, bh)
        else:
            layers.append((next(it), next(it), next(it), next(it)))
    ln_g = [next(it) for _ in range(n_layers)]
    ln_b = [next(it) for _ in range(n_layers)]
    wmv_ref = next(it)
    bmv_ref = next(it)
    mv_ref = next(it)                                              # output (bb, 2*latent_pad)
    y_scr = [next(it) for _ in range(n_layers - 1)]                # inter-layer activations (bf16)
    xp_scr = [next(it) for _ in range(n_layers - 1)]               # staged input projections (f32)

    bb = batch_block
    states = []
    cur_xp_ref = x0_ref
    for l in range(n_layers):
        wi_ref, bin_ref, wh_ref, bh_ref = layers[l]
        if l > 0:
            # Hoisted input projection for ALL timesteps of this layer: one big MXU matmul,
            # staged in VMEM (no HBM round trip of the inter-layer activation).
            xp_scr[l - 1][...] = jnp.dot(y_scr[l - 1][...], wi_ref[...],
                                         preferred_element_type=jnp.float32)
            cur_xp_ref = xp_scr[l - 1]
        y_ref = y_scr[l] if l < n_layers - 1 else None             # last layer: no dead seq output
        h = _gru_recurrence(cur_xp_ref, wh_ref, bh_ref, bin_ref, y_ref,
                            seq_len=seq_len, bb=bb, h_dim=hidden_dims[l])
        states.append(h)

    # Head: per-state LayerNorm -> concat -> ONE fused (bb, Hsum) @ (Hsum, 2*latent_pad) matmul.
    normed = []
    for s, g_ref, b_ref in zip(states, ln_g, ln_b):
        mean = jnp.mean(s, axis=-1, keepdims=True)
        var = jnp.mean((s - mean) ** 2, axis=-1, keepdims=True)
        normed.append((s - mean) * lax.rsqrt(var + _LN_EPS) * g_ref[...] + b_ref[...])
    cat = jnp.concatenate(normed, axis=-1).astype(jnp.bfloat16)
    mv_ref[...] = (jnp.dot(cat, wmv_ref[...], preferred_element_type=jnp.float32)
                   + bmv_ref[...])


# ---------------------------------------------------------------------------
# Encoder forward (wrapper): gather + one pallas_call
# ---------------------------------------------------------------------------
def encoder_forward(ids, params, *, latent_dim):
    """ids: (T, B) int32 token ids (seq-major, nn.GRU batch_first=False)."""
    seq_len, batch = ids.shape
    hidden_dims = tuple(p["wh"].shape[0] for p in params["gru"])
    n_layers = len(hidden_dims)
    p0_cols = params["proj_table0"].shape[1]
    two_lpad = params["head"]["bmv"].shape[-1]

    bb, nb = _choose_batch_block(batch, seq_len, hidden_dims, p0_cols)

    # Dropout == identity (inference).
    # Block-major flatten (row = blk*(T*bb) + t*bb + b_in_blk) then a single XLA gather of the
    # fused embedding+layer-0 projection table: no per-token pallas launches, one HBM pass.
    ids_bm = ids.reshape(seq_len, nb, bb).transpose(1, 0, 2).reshape(-1).astype(jnp.int32)
    x0 = jnp.take(params["proj_table0"], ids_bm, axis=0)          # (B*T, 3*H0) f32

    kernel = functools.partial(_encoder_kernel, seq_len=seq_len, batch_block=bb,
                               hidden_dims=hidden_dims, n_layers=n_layers)

    args = [x0]
    in_specs = [pl.BlockSpec((seq_len * bb, p0_cols), lambda i: (i, 0))]
    for l, p in enumerate(params["gru"]):
        if l > 0:
            args += [p["wi"], p["bin"]]
            in_specs += [_full_spec(p["wi"]), _full_spec(p["bin"])]
        args += [p["wh"], p["bh"]]
        in_specs += [_full_spec(p["wh"]), _full_spec(p["bh"])]
    head = params["head"]
    for g in head["ln_g"]:
        args.append(g); in_specs.append(_full_spec(g))
    for b in head["ln_b"]:
        args.append(b); in_specs.append(_full_spec(b))
    args += [head["wmv"], head["bmv"]]
    in_specs += [_full_spec(head["wmv"]), _full_spec(head["bmv"])]

    scratch_shapes = []
    for l in range(1, n_layers):
        scratch_shapes.append(pltpu.VMEM((seq_len * bb, hidden_dims[l - 1]), jnp.bfloat16))
    for l in range(1, n_layers):
        scratch_shapes.append(pltpu.VMEM((seq_len * bb, 3 * hidden_dims[l]), jnp.float32))

    mv = pl.pallas_call(
        kernel,
        out_shape=jax.ShapeDtypeStruct((batch, two_lpad), jnp.float32),
        grid=(nb,),
        in_specs=in_specs,
        out_specs=pl.BlockSpec((bb, two_lpad), lambda i: (i, 0)),
        scratch_shapes=scratch_shapes,
        compiler_params=pltpu.CompilerParams(
            dimension_semantics=("parallel",),               # v7x: batch blocks across the 2 TCs
            vmem_limit_bytes=_vmem_budget_bytes()),
    )(*args)

    return mv[:, :latent_dim], mv[:, latent_dim:2 * latent_dim]


# ---------------------------------------------------------------------------
# Parameters: synthetic init (shapes follow Encoder.__init__) + one-time preprocessing
# ---------------------------------------------------------------------------
def init_params(key, vocab_size, embedding_dim, enc_gru_layer, latent_dim):
    keys = iter(jax.random.split(key, 256))

    def nrm(shape, scale=0.1):
        return (scale * jax.random.normal(next(keys), shape)).astype(jnp.float32)

    emb = nrm((vocab_size, embedding_dim))
    emb = emb.at[0].set(0.0)                                      # nn.Embedding(padding_idx=0)

    dims = [embedding_dim] + list(enc_gru_layer)
    gru = []
    for i in range(len(enc_gru_layer)):
        din, h = dims[i], dims[i + 1]
        # PyTorch gate order (r, z, n), weights pre-transposed to (in, out), fused along out.
        gru.append(dict(
            wi=jnp.concatenate([nrm((din, h)) for _ in range(3)], axis=1),   # (din, 3h)
            wh=jnp.concatenate([nrm((h, h)) for _ in range(3)], axis=1),     # (h, 3h)
            bi=nrm((1, 3 * h)),
            bh=nrm((1, 3 * h)),
        ))

    ln_g = [jnp.ones((1, h), jnp.float32) for h in enc_gru_layer]            # LayerNorm defaults
    ln_b = [jnp.zeros((1, h), jnp.float32) for h in enc_gru_layer]

    hsum = sum(enc_gru_layer)
    wmv = jnp.concatenate([nrm((hsum, latent_dim)), nrm((hsum, latent_dim))], axis=1)  # [Wmu|Wvar]
    bmv = jnp.concatenate([nrm((1, latent_dim)), nrm((1, latent_dim))], axis=1)

    return dict(embedding=emb, gru=gru, head=dict(ln_g=ln_g, ln_b=ln_b, wmv=wmv, bmv=bmv))


def preprocess_params(raw):
    """One-time parameter preprocessing (load time, not per forward)."""
    out = {}
    g0 = raw["gru"][0]
    # Fold embedding lookup + layer-0 input projection + full input bias into one gather table.
    out["proj_table0"] = (raw["embedding"] @ g0["wi"] + g0["bi"]).astype(jnp.float32)

    gru = []
    for l, p in enumerate(raw["gru"]):
        h = p["wh"].shape[0]
        q = dict(wh=p["wh"].astype(jnp.bfloat16))
        if l == 0:
            q["bh"] = p["bh"].astype(jnp.float32)                 # bi already inside proj_table0
        else:
            # Fold the r,z input biases into the hidden bias (added per step anyway); keep the
            # n-gate input bias separate (it must NOT be scaled by r).
            fold = jnp.concatenate([p["bi"][:, :2 * h], jnp.zeros((1, h), jnp.float32)], axis=1)
            q["bh"] = (p["bh"] + fold).astype(jnp.float32)
            q["bin"] = p["bi"][:, 2 * h:].astype(jnp.float32)
            q["wi"] = p["wi"].astype(jnp.bfloat16)
        gru.append(q)
    out["gru"] = gru

    # Head: zero-pad the fused [W_mu|W_var] output dim to a multiple of 128 -> lane-dense stores
    # and MXU-aligned N; the wrapper slices mu / log_var back out of the padded result.
    h = raw["head"]
    two_l = h["bmv"].shape[-1]
    two_lpad = ((two_l + 127) // 128) * 128
    pad = two_lpad - two_l
    out["head"] = dict(
        ln_g=list(h["ln_g"]), ln_b=list(h["ln_b"]),
        wmv=jnp.pad(h["wmv"], ((0, 0), (0, pad))).astype(jnp.bfloat16),
        bmv=jnp.pad(h["bmv"], ((0, 0), (0, pad))).astype(jnp.float32))
    return out


# ---------------------------------------------------------------------------
# Pure-JAX reference (mimics the kernel's bf16 matmul numerics) for a self-check
# ---------------------------------------------------------------------------
def encoder_reference(ids, raw):
    f32, bf16 = jnp.float32, jnp.bfloat16
    seq_len, batch = ids.shape
    x = raw["embedding"][ids]                                     # (T, B, E) f32
    states = []
    for l, p in enumerate(raw["gru"]):
        h_dim = p["wh"].shape[0]
        xf = x.reshape(seq_len * batch, -1)
        if l == 0:
            xp_all = (xf @ p["wi"] + p["bi"]).reshape(seq_len, batch, 3 * h_dim)
        else:
            xp_all = (jnp.dot(xf.astype(bf16), p["wi"].astype(bf16),
                              preferred_element_type=f32)
                      + p["bi"]).reshape(seq_len, batch, 3 * h_dim)
        wh = p["wh"].astype(bf16)
        h = jnp.zeros((batch, h_dim), f32)
        ys = []
        for t in range(seq_len):
            hp = jnp.dot(h.astype(bf16), wh, preferred_element_type=f32) + p["bh"]
            xp = xp_all[t]
            r = jax.nn.sigmoid(xp[:, :h_dim] + hp[:, :h_dim])
            z = jax.nn.sigmoid(xp[:, h_dim:2 * h_dim] + hp[:, h_dim:2 * h_dim])
            n = jnp.tanh(xp[:, 2 * h_dim:] + r * hp[:, 2 * h_dim:])
            h = (1.0 - z) * n + z * h
            ys.append(h)
        x = jnp.stack(ys).astype(bf16)
        states.append(h)
    head = raw["head"]
    normed = []
    for s, g, b in zip(states, head["ln_g"], head["ln_b"]):
        mean = jnp.mean(s, -1, keepdims=True)
        var = jnp.mean((s - mean) ** 2, -1, keepdims=True)
        normed.append((s - mean) * lax.rsqrt(var + _LN_EPS) * g + b)
    cat = jnp.concatenate(normed, axis=-1).astype(bf16)
    mv = jnp.dot(cat, head["wmv"].astype(bf16), preferred_element_type=f32) + head["bmv"]
    latent = head["bmv"].shape[-1] // 2
    return mv[:, :latent], mv[:, latent:]


if __name__ == "__main__":
    vocab_size = 32
    embedding_dim = 16
    enc_gru_layer = [32, 32]
    latent_dim = 16
    seq_len, batch = 8, 4

    key = jax.random.PRNGKey(0)
    raw = init_params(key, vocab_size, embedding_dim, enc_gru_layer, latent_dim)
    params = preprocess_params(raw)
    ids = jax.random.randint(jax.random.fold_in(key, 999), (seq_len, batch), 0,
                             vocab_size, dtype=jnp.int32)

    fwd = jax.jit(encoder_forward, static_argnames=("latent_dim",))
    mu, log_var = fwd(ids, params, latent_dim=latent_dim)
    jax.block_until_ready((mu, log_var))
    assert mu.shape == (batch, latent_dim) and log_var.shape == (batch, latent_dim)

    mu_ref, lv_ref = encoder_reference(ids, raw)
    err = max(float(jnp.max(jnp.abs(mu - mu_ref))),
              float(jnp.max(jnp.abs(log_var - lv_ref))))
    assert err < 5e-2, f"kernel/reference mismatch: max abs err {err}"

    print("KERNEL_OK")
</pallas_src>

<mosaic_0001>
module attributes {stable_mosaic.version = 11 : i64} {
  func.func @_encoder_kernel(%arg0: i32, %arg1: memref<32x96xf32, #tpu.memory_space<vmem>>, %arg2: memref<32x96xbf16, #tpu.memory_space<vmem>>, %arg3: memref<1x96xf32, #tpu.memory_space<vmem>>, %arg4: memref<32x96xbf16, #tpu.memory_space<vmem>>, %arg5: memref<1x32xf32, #tpu.memory_space<vmem>>, %arg6: memref<32x96xbf16, #tpu.memory_space<vmem>>, %arg7: memref<1x96xf32, #tpu.memory_space<vmem>>, %arg8: memref<1x32xf32, #tpu.memory_space<vmem>>, %arg9: memref<1x32xf32, #tpu.memory_space<vmem>>, %arg10: memref<1x32xf32, #tpu.memory_space<vmem>>, %arg11: memref<1x32xf32, #tpu.memory_space<vmem>>, %arg12: memref<64x128xbf16, #tpu.memory_space<vmem>>, %arg13: memref<1x128xf32, #tpu.memory_space<vmem>>, %arg14: memref<4x128xf32, #tpu.memory_space<vmem>>, %arg15: memref<32x32xbf16, #tpu.memory_space<vmem>>, %arg16: memref<32x96xf32, #tpu.memory_space<vmem>>) attributes {dimension_semantics = [#tpu.dimension_semantics<parallel>], iteration_bounds = array<i64: 1>, scalar_prefetch = 0 : i64, scratch_operands = 2 : i64, tpu.core_type = #tpu.core_type<tc>, window_params = [{transform_indices = @transform_0, window_bounds = array<i64: 32, 96>}, {pipeline_mode = #tpu.pipeline_mode<synchronous>, transform_indices = @transform_1, window_bounds = array<i64: 32, 96>}, {pipeline_mode = #tpu.pipeline_mode<synchronous>, transform_indices = @transform_2, window_bounds = array<i64: 1, 96>}, {pipeline_mode = #tpu.pipeline_mode<synchronous>, transform_indices = @transform_3, window_bounds = array<i64: 32, 96>}, {pipeline_mode = #tpu.pipeline_mode<synchronous>, transform_indices = @transform_4, window_bounds = array<i64: 1, 32>}, {pipeline_mode = #tpu.pipeline_mode<synchronous>, transform_indices = @transform_5, window_bounds = array<i64: 32, 96>}, {pipeline_mode = #tpu.pipeline_mode<synchronous>, transform_indices = @transform_6, window_bounds = array<i64: 1, 96>}, {pipeline_mode = #tpu.pipeline_mode<synchronous>, transform_indices = @transform_7, window_bounds = array<i64: 1, 32>}, {pipeline_mode = #tpu.pipeline_mode<synchronous>, transform_indices = @transform_8, window_bounds = array<i64: 1, 32>}, {pipeline_mode = #tpu.pipeline_mode<synchronous>, transform_indices = @transform_9, window_bounds = array<i64: 1, 32>}, {pipeline_mode = #tpu.pipeline_mode<synchronous>, transform_indices = @transform_10, window_bounds = array<i64: 1, 32>}, {pipeline_mode = #tpu.pipeline_mode<synchronous>, transform_indices = @transform_11, window_bounds = array<i64: 64, 128>}, {pipeline_mode = #tpu.pipeline_mode<synchronous>, transform_indices = @transform_12, window_bounds = array<i64: 1, 128>}, {transform_indices = @transform_13, window_bounds = array<i64: 4, 128>}]} {
    %c0 = arith.constant 0 : index
    %c0_0 = arith.constant 0 : index
    %0 = vector.load %arg2[%c0, %c0_0] : memref<32x96xbf16, #tpu.memory_space<vmem>>, vector<32x96xbf16>
    %c0_1 = arith.constant 0 : index
    %c0_2 = arith.constant 0 : index
    %1 = vector.load %arg3[%c0_1, %c0_2] : memref<1x96xf32, #tpu.memory_space<vmem>>, vector<1x96xf32>
    %2 = vector.shape_cast %1 : vector<1x96xf32> to vector<1x96xf32>
    %3 = vector.broadcast %2 : vector<1x96xf32> to vector<4x96xf32>
    %cst = arith.constant 0.000000e+00 : f32
    %4 = vector.broadcast %cst : f32 to vector<4x32xf32>
    %c0_3 = arith.constant 0 : index
    %c0_4 = arith.constant 0 : index
    %5 = vector.load %arg1[%c0_3, %c0_4] : memref<32x96xf32, #tpu.memory_space<vmem>>, vector<4x96xf32>
    %6 = arith.truncf %4 : vector<4x32xf32> to vector<4x32xbf16>
    %cst_5 = arith.constant dense<0.000000e+00> : vector<4x96xf32>
    %7 = tpu.matmul %6, %0, %cst_5 {dimension_numbers = #tpu.dot_dimension_numbers<[1], [0], [0], [1], [0, 0, 1, 1], [], []>} : vector<4x32xbf16>, vector<32x96xbf16>, vector<4x96xf32> -> vector<4x96xf32>
    %8 = arith.addf %7, %3 : vector<4x96xf32>
    %9 = vector.extract_strided_slice %5 {offsets = [0, 0], sizes = [4, 32], strides = [1, 1]} : vector<4x96xf32> to vector<4x32xf32>
    %10 = vector.extract_strided_slice %8 {offsets = [0, 0], sizes = [4, 32], strides = [1, 1]} : vector<4x96xf32> to vector<4x32xf32>
    %11 = arith.addf %9, %10 : vector<4x32xf32>
    %12 = arith.negf %11 : vector<4x32xf32>
    %13 = math.exp %12 : vector<4x32xf32>
    %cst_6 = arith.constant 1.000000e+00 : f32
    %14 = vector.broadcast %cst_6 : f32 to vector<4x32xf32>
    %15 = arith.addf %14, %13 : vector<4x32xf32>
    %16 = arith.divf %14, %15 : vector<4x32xf32>
    %17 = vector.extract_strided_slice %5 {offsets = [0, 32], sizes = [4, 32], strides = [1, 1]} : vector<4x96xf32> to vector<4x32xf32>
    %18 = vector.extract_strided_slice %8 {offsets = [0, 32], sizes = [4, 32], strides = [1, 1]} : vector<4x96xf32> to vector<4x32xf32>
    %19 = arith.addf %17, %18 : vector<4x32xf32>
    %20 = arith.negf %19 : vector<4x32xf32>
    %21 = math.exp %20 : vector<4x32xf32>
    %cst_7 = arith.constant 1.000000e+00 : f32
    %22 = vector.broadcast %cst_7 : f32 to vector<4x32xf32>
    %23 = arith.addf %22, %21 : vector<4x32xf32>
    %24 = arith.divf %22, %23 : vector<4x32xf32>
    %25 = vector.extract_strided_slice %5 {offsets = [0, 64], sizes = [4, 32], strides = [1, 1]} : vector<4x96xf32> to vector<4x32xf32>
    %26 = vector.extract_strided_slice %8 {offsets = [0, 64], sizes = [4, 32], strides = [1, 1]} : vector<4x96xf32> to vector<4x32xf32>
    %27 = arith.mulf %16, %26 : vector<4x32xf32>
    %28 = arith.addf %25, %27 : vector<4x32xf32>
    %29 = math.tanh %28 : vector<4x32xf32>
    %cst_8 = arith.constant 1.000000e+00 : f32
    %30 = vector.broadcast %cst_8 : f32 to vector<4x32xf32>
    %31 = arith.subf %30, %24 : vector<4x32xf32>
    %32 = arith.mulf %31, %29 : vector<4x32xf32>
    %33 = arith.mulf %24, %4 : vector<4x32xf32>
    %34 = arith.addf %32, %33 : vector<4x32xf32>
    %35 = arith.truncf %34 : vector<4x32xf32> to vector<4x32xbf16>
    %c0_9 = arith.constant 0 : index
    %c0_10 = arith.constant 0 : index
    %36 = vector.load %arg15[%c0_9, %c0_10] : memref<32x32xbf16, #tpu.memory_space<vmem>>, vector<4x32xbf16>
    tpu.vector_store %arg15[%c0_9, %c0_10], %35 {strides = array<i32>} : memref<32x32xbf16, #tpu.memory_space<vmem>>, vector<4x32xbf16>,
    %c4 = arith.constant 4 : index
    %c0_11 = arith.constant 0 : index
    %37 = vector.load %arg1[%c4, %c0_11] : memref<32x96xf32, #tpu.memory_space<vmem>>, vector<4x96xf32>
    %38 = arith.truncf %34 : vector<4x32xf32> to vector<4x32xbf16>
    %cst_12 = arith.constant dense<0.000000e+00> : vector<4x96xf32>
    %39 = tpu.matmul %38, %0, %cst_12 {dimension_numbers = #tpu.dot_dimension_numbers<[1], [0], [0], [1], [0, 0, 1, 1], [], []>} : vector<4x32xbf16>, vector<32x96xbf16>, vector<4x96xf32> -> vector<4x96xf32>
    %40 = arith.addf %39, %3 : vector<4x96xf32>
    %41 = vector.extract_strided_slice %37 {offsets = [0, 0], sizes = [4, 32], strides = [1, 1]} : vector<4x96xf32> to vector<4x32xf32>
    %42 = vector.extract_strided_slice %40 {offsets = [0, 0], sizes = [4, 32], strides = [1, 1]} : vector<4x96xf32> to vector<4x32xf32>
    %43 = arith.addf %41, %42 : vector<4x32xf32>
    %44 = arith.negf %43 : vector<4x32xf32>
    %45 = math.exp %44 : vector<4x32xf32>
    %cst_13 = arith.constant 1.000000e+00 : f32
    %46 = vector.broadcast %cst_13 : f32 to vector<4x32xf32>
    %47 = arith.addf %46, %45 : vector<4x32xf32>
    %48 = arith.divf %46, %47 : vector<4x32xf32>
    %49 = vector.extract_strided_slice %37 {offsets = [0, 32], sizes = [4, 32], strides = [1, 1]} : vector<4x96xf32> to vector<4x32xf32>
    %50 = vector.extract_strided_slice %40 {offsets = [0, 32], sizes = [4, 32], strides = [1, 1]} : vector<4x96xf32> to vector<4x32xf32>
    %51 = arith.addf %49, %50 : vector<4x32xf32>
    %52 = arith.negf %51 : vector<4x32xf32>
    %53 = math.exp %52 : vector<4x32xf32>
    %cst_14 = arith.constant 1.000000e+00 : f32
    %54 = vector.broadcast %cst_14 : f32 to vector<4x32xf32>
    %55 = arith.addf %54, %53 : vector<4x32xf32>
    %56 = arith.divf %54, %55 : vector<4x32xf32>
    %57 = vector.extract_strided_slice %37 {offsets = [0, 64], sizes = [4, 32], strides = [1, 1]} : vector<4x96xf32> to vector<4x32xf32>
    %58 = vector.extract_strided_slice %40 {offsets = [0, 64], sizes = [4, 32], strides = [1, 1]} : vector<4x96xf32> to vector<4x32xf32>
    %59 = arith.mulf %48, %58 : vector<4x32xf32>
    %60 = arith.addf %57, %59 : vector<4x32xf32>
    %61 = math.tanh %60 : vector<4x32xf32>
    %cst_15 = arith.constant 1.000000e+00 : f32
    %62 = vector.broadcast %cst_15 : f32 to vector<4x32xf32>
    %63 = arith.subf %62, %56 : vector<4x32xf32>
    %64 = arith.mulf %63, %61 : vector<4x32xf32>
    %65 = arith.mulf %56, %34 : vector<4x32xf32>
    %66 = arith.addf %64, %65 : vector<4x32xf32>
    %67 = arith.truncf %66 : vector<4x32xf32> to vector<4x32xbf16>
    %c4_16 = arith.constant 4 : index
    %c0_17 = arith.constant 0 : index
    %68 = vector.load %arg15[%c4_16, %c0_17] : memref<32x32xbf16, #tpu.memory_space<vmem>>, vector<4x32xbf16>
    tpu.vector_store %arg15[%c4_16, %c0_17], %67 {strides = array<i32>} : memref<32x32xbf16, #tpu.memory_space<vmem>>, vector<4x32xbf16>,
    %c8 = arith.constant 8 : index
    %c0_18 = arith.constant 0 : index
    %69 = vector.load %arg1[%c8, %c0_18] : memref<32x96xf32, #tpu.memory_space<vmem>>, vector<4x96xf32>
    %70 = arith.truncf %66 : vector<4x32xf32> to vector<4x32xbf16>
    %cst_19 = arith.constant dense<0.000000e+00> : vector<4x96xf32>
    %71 = tpu.matmul %70, %0, %cst_19 {dimension_numbers = #tpu.dot_dimension_numbers<[1], [0], [0], [1], [0, 0, 1, 1], [], []>} : vector<4x32xbf16>, vector<32x96xbf16>, vector<4x96xf32> -> vector<4x96xf32>
    %72 = arith.addf %71, %3 : vector<4x96xf32>
    %73 = vector.extract_strided_slice %69 {offsets = [0, 0], sizes = [4, 32], strides = [1, 1]} : vector<4x96xf32> to vector<4x32xf32>
    %74 = vector.extract_strided_slice %72 {offsets = [0, 0], sizes = [4, 32], strides = [1, 1]} : vector<4x96xf32> to vector<4x32xf32>
    %75 = arith.addf %73, %74 : vector<4x32xf32>
    %76 = arith.negf %75 : vector<4x32xf32>
    %77 = math.exp %76 : vector<4x32xf32>
    %cst_20 = arith.constant 1.000000e+00 : f32
    %78 = vector.broadcast %cst_20 : f32 to vector<4x32xf32>
    %79 = arith.addf %78, %77 : vector<4x32xf32>
    %80 = arith.divf %78, %79 : vector<4x32xf32>
    %81 = vector.extract_strided_slice %69 {offsets = [0, 32], sizes = [4, 32], strides = [1, 1]} : vector<4x96xf32> to vector<4x32xf32>
    %82 = vector.extract_strided_slice %72 {offsets = [0, 32], sizes = [4, 32], strides = [1, 1]} : vector<4x96xf32> to vector<4x32xf32>
    %83 = arith.addf %81, %82 : vector<4x32xf32>
    %84 = arith.negf %83 : vector<4x32xf32>
    %85 = math.exp %84 : vector<4x32xf32>
    %cst_21 = arith.constant 1.000000e+00 : f32
    %86 = vector.broadcast %cst_21 : f32 to vector<4x32xf32>
    %87 = arith.addf %86, %85 : vector<4x32xf32>
    %88 = arith.divf %86, %87 : vector<4x32xf32>
    %89 = vector.extract_strided_slice %69 {offsets = [0, 64], sizes = [4, 32], strides = [1, 1]} : vector<4x96xf32> to vector<4x32xf32>
    %90 = vector.extract_strided_slice %72 {offsets = [0, 64], sizes = [4, 32], strides = [1, 1]} : vector<4x96xf32> to vector<4x32xf32>
    %91 = arith.mulf %80, %90 : vector<4x32xf32>
    %92 = arith.addf %89, %91 : vector<4x32xf32>
    %93 = math.tanh %92 : vector<4x32xf32>
    %cst_22 = arith.constant 1.000000e+00 : f32
    %94 = vector.broadcast %cst_22 : f32 to vector<4x32xf32>
    %95 = arith.subf %94, %88 : vector<4x32xf32>
    %96 = arith.mulf %95, %93 : vector<4x32xf32>
    %97 = arith.mulf %88, %66 : vector<4x32xf32>
    %98 = arith.addf %96, %97 : vector<4x32xf32>
    %99 = arith.truncf %98 : vector<4x32xf32> to vector<4x32xbf16>
    %c8_23 = arith.constant 8 : index
    %c0_24 = arith.constant 0 : index
    %100 = vector.load %arg15[%c8_23, %c0_24] : memref<32x32xbf16, #tpu.memory_space<vmem>>, vector<4x32xbf16>
    tpu.vector_store %arg15[%c8_23, %c0_24], %99 {strides = array<i32>} : memref<32x32xbf16, #tpu.memory_space<vmem>>, vector<4x32xbf16>,
    %c12 = arith.constant 12 : index
    %c0_25 = arith.constant 0 : index
    %101 = vector.load %arg1[%c12, %c0_25] : memref<32x96xf32, #tpu.memory_space<vmem>>, vector<4x96xf32>
    %102 = arith.truncf %98 : vector<4x32xf32> to vector<4x32xbf16>
    %cst_26 = arith.constant dense<0.000000e+00> : vector<4x96xf32>
    %103 = tpu.matmul %102, %0, %cst_26 {dimension_numbers = #tpu.dot_dimension_numbers<[1], [0], [0], [1], [0, 0, 1, 1], [], []>} : vector<4x32xbf16>, vector<32x96xbf16>, vector<4x96xf32> -> vector<4x96xf32>
    %104 = arith.addf %103, %3 : vector<4x96xf32>
    %105 = vector.extract_strided_slice %101 {offsets = [0, 0], sizes = [4, 32], strides = [1, 1]} : vector<4x96xf32> to vector<4x32xf32>
    %106 = vector.extract_strided_slice %104 {offsets = [0, 0], sizes = [4, 32], strides = [1, 1]} : vector<4x96xf32> to vector<4x32xf32>
    %107 = arith.addf %105, %106 : vector<4x32xf32>
    %108 = arith.negf %107 : vector<4x32xf32>
    %109 = math.exp %108 : vector<4x32xf32>
    %cst_27 = arith.constant 1.000000e+00 : f32
    %110 = vector.broadcast %cst_27 : f32 to vector<4x32xf32>
    %111 = arith.addf %110, %109 : vector<4x32xf32>
    %112 = arith.divf %110, %111 : vector<4x32xf32>
    %113 = vector.extract_strided_slice %101 {offsets = [0, 32], sizes = [4, 32], strides = [1, 1]} : vector<4x96xf32> to vector<4x32xf32>
    %114 = vector.extract_strided_slice %104 {offsets = [0, 32], sizes = [4, 32], strides = [1, 1]} : vector<4x96xf32> to vector<4x32xf32>
    %115 = arith.addf %113, %114 : vector<4x32xf32>
    %116 = arith.negf %115 : vector<4x32xf32>
    %117 = math.exp %116 : vector<4x32xf32>
    %cst_28 = arith.constant 1.000000e+00 : f32
    %118 = vector.broadcast %cst_28 : f32 to vector<4x32xf32>
    %119 = arith.addf %118, %117 : vector<4x32xf32>
    %120 = arith.divf %118, %119 : vector<4x32xf32>
    %121 = vector.extract_strided_slice %101 {offsets = [0, 64], sizes = [4, 32], strides = [1, 1]} : vector<4x96xf32> to vector<4x32xf32>
    %122 = vector.extract_strided_slice %104 {offsets = [0, 64], sizes = [4, 32], strides = [1, 1]} : vector<4x96xf32> to vector<4x32xf32>
    %123 = arith.mulf %112, %122 : vector<4x32xf32>
    %124 = arith.addf %121, %123 : vector<4x32xf32>
    %125 = math.tanh %124 : vector<4x32xf32>
    %cst_29 = arith.constant 1.000000e+00 : f32
    %126 = vector.broadcast %cst_29 : f32 to vector<4x32xf32>
    %127 = arith.subf %126, %120 : vector<4x32xf32>
    %128 = arith.mulf %127, %125 : vector<4x32xf32>
    %129 = arith.mulf %120, %98 : vector<4x32xf32>
    %130 = arith.addf %128, %129 : vector<4x32xf32>
    %131 = arith.truncf %130 : vector<4x32xf32> to vector<4x32xbf16>
    %c12_30 = arith.constant 12 : index
    %c0_31 = arith.constant 0 : index
    %132 = vector.load %arg15[%c12_30, %c0_31] : memref<32x32xbf16, #tpu.memory_space<vmem>>, vector<4x32xbf16>
    tpu.vector_store %arg15[%c12_30, %c0_31], %131 {strides = array<i32>} : memref<32x32xbf16, #tpu.memory_space<vmem>>, vector<4x32xbf16>,
    %c16 = arith.constant 16 : index
    %c0_32 = arith.constant 0 : index
    %133 = vector.load %arg1[%c16, %c0_32] : memref<32x96xf32, #tpu.memory_space<vmem>>, vector<4x96xf32>
    %134 = arith.truncf %130 : vector<4x32xf32> to vector<4x32xbf16>
    %cst_33 = arith.constant dense<0.000000e+00> : vector<4x96xf32>
    %135 = tpu.matmul %134, %0, %cst_33 {dimension_numbers = #tpu.dot_dimension_numbers<[1], [0], [0], [1], [0, 0, 1, 1], [], []>} : vector<4x32xbf16>, vector<32x96xbf16>, vector<4x96xf32> -> vector<4x96xf32>
    %136 = arith.addf %135, %3 : vector<4x96xf32>
    %137 = vector.extract_strided_slice %133 {offsets = [0, 0], sizes = [4, 32], strides = [1, 1]} : vector<4x96xf32> to vector<4x32xf32>
    %138 = vector.extract_strided_slice %136 {offsets = [0, 0], sizes = [4, 32], strides = [1, 1]} : vector<4x96xf32> to vector<4x32xf32>
    %139 = arith.addf %137, %138 : vector<4x32xf32>
    %140 = arith.negf %139 : vector<4x32xf32>
    %141 = math.exp %140 : vector<4x32xf32>
    %cst_34 = arith.constant 1.000000e+00 : f32
    %142 = vector.broadcast %cst_34 : f32 to vector<4x32xf32>
    %143 = arith.addf %142, %141 : vector<4x32xf32>
    %144 = arith.divf %142, %143 : vector<4x32xf32>
    %145 = vector.extract_strided_slice %133 {offsets = [0, 32], sizes = [4, 32], strides = [1, 1]} : vector<4x96xf32> to vector<4x32xf32>
    %146 = vector.extract_strided_slice %136 {offsets = [0, 32], sizes = [4, 32], strides = [1, 1]} : vector<4x96xf32> to vector<4x32xf32>
    %147 = arith.addf %145, %146 : vector<4x32xf32>
    %148 = arith.negf %147 : vector<4x32xf32>
    %149 = math.exp %148 : vector<4x32xf32>
    %cst_35 = arith.constant 1.000000e+00 : f32
    %150 = vector.broadcast %cst_35 : f32 to vector<4x32xf32>
    %151 = arith.addf %150, %149 : vector<4x32xf32>
    %152 = arith.divf %150, %151 : vector<4x32xf32>
    %153 = vector.extract_strided_slice %133 {offsets = [0, 64], sizes = [4, 32], strides = [1, 1]} : vector<4x96xf32> to vector<4x32xf32>
    %154 = vector.extract_strided_slice %136 {offsets = [0, 64], sizes = [4, 32], strides = [1, 1]} : vector<4x96xf32> to vector<4x32xf32>
    %155 = arith.mulf %144, %154 : vector<4x32xf32>
    %156 = arith.addf %153, %155 : vector<4x32xf32>
    %157 = math.tanh %156 : vector<4x32xf32>
    %cst_36 = arith.constant 1.000000e+00 : f32
    %158 = vector.broadcast %cst_36 : f32 to vector<4x32xf32>
    %159 = arith.subf %158, %152 : vector<4x32xf32>
    %160 = arith.mulf %159, %157 : vector<4x32xf32>
    %161 = arith.mulf %152, %130 : vector<4x32xf32>
    %162 = arith.addf %160, %161 : vector<4x32xf32>
    %163 = arith.truncf %162 : vector<4x32xf32> to vector<4x32xbf16>
    %c16_37 = arith.constant 16 : index
    %c0_38 = arith.constant 0 : index
    %164 = vector.load %arg15[%c16_37, %c0_38] : memref<32x32xbf16, #tpu.memory_space<vmem>>, vector<4x32xbf16>
    tpu.vector_store %arg15[%c16_37, %c0_38], %163 {strides = array<i32>} : memref<32x32xbf16, #tpu.memory_space<vmem>>, vector<4x32xbf16>,
    %c20 = arith.constant 20 : index
    %c0_39 = arith.constant 0 : index
    %165 = vector.load %arg1[%c20, %c0_39] : memref<32x96xf32, #tpu.memory_space<vmem>>, vector<4x96xf32>
    %166 = arith.truncf %162 : vector<4x32xf32> to vector<4x32xbf16>
    %cst_40 = arith.constant dense<0.000000e+00> : vector<4x96xf32>
    %167 = tpu.matmul %166, %0, %cst_40 {dimension_numbers = #tpu.dot_dimension_numbers<[1], [0], [0], [1], [0, 0, 1, 1], [], []>} : vector<4x32xbf16>, vector<32x96xbf16>, vector<4x96xf32> -> vector<4x96xf32>
    %168 = arith.addf %167, %3 : vector<4x96xf32>
    %169 = vector.extract_strided_slice %165 {offsets = [0, 0], sizes = [4, 32], strides = [1, 1]} : vector<4x96xf32> to vector<4x32xf32>
    %170 = vector.extract_strided_slice %168 {offsets = [0, 0], sizes = [4, 32], strides = [1, 1]} : vector<4x96xf32> to vector<4x32xf32>
    %171 = arith.addf %169, %170 : vector<4x32xf32>
    %172 = arith.negf %171 : vector<4x32xf32>
    %173 = math.exp %172 : vector<4x32xf32>
    %cst_41 = arith.constant 1.000000e+00 : f32
    %174 = vector.broadcast %cst_41 : f32 to vector<4x32xf32>
    %175 = arith.addf %174, %173 : vector<4x32xf32>
    %176 = arith.divf %174, %175 : vector<4x32xf32>
    %177 = vector.extract_strided_slice %165 {offsets = [0, 32], sizes = [4, 32], strides = [1, 1]} : vector<4x96xf32> to vector<4x32xf32>
    %178 = vector.extract_strided_slice %168 {offsets = [0, 32], sizes = [4, 32], strides = [1, 1]} : vector<4x96xf32> to vector<4x32xf32>
    %179 = arith.addf %177, %178 : vector<4x32xf32>
    %180 = arith.negf %179 : vector<4x32xf32>
    %181 = math.exp %180 : vector<4x32xf32>
    %cst_42 = arith.constant 1.000000e+00 : f32
    %182 = vector.broadcast %cst_42 : f32 to vector<4x32xf32>
    %183 = arith.addf %182, %181 : vector<4x32xf32>
    %184 = arith.divf %182, %183 : vector<4x32xf32>
    %185 = vector.extract_strided_slice %165 {offsets = [0, 64], sizes = [4, 32], strides = [1, 1]} : vector<4x96xf32> to vector<4x32xf32>
    %186 = vector.extract_strided_slice %168 {offsets = [0, 64], sizes = [4, 32], strides = [1, 1]} : vector<4x96xf32> to vector<4x32xf32>
    %187 = arith.mulf %176, %186 : vector<4x32xf32>
    %188 = arith.addf %185, %187 : vector<4x32xf32>
    %189 = math.tanh %188 : vector<4x32xf32>
    %cst_43 = arith.constant 1.000000e+00 : f32
    %190 = vector.broadcast %cst_43 : f32 to vector<4x32xf32>
    %191 = arith.subf %190, %184 : vector<4x32xf32>
    %192 = arith.mulf %191, %189 : vector<4x32xf32>
    %193 = arith.mulf %184, %162 : vector<4x32xf32>
    %194 = arith.addf %192, %193 : vector<4x32xf32>
    %195 = arith.truncf %194 : vector<4x32xf32> to vector<4x32xbf16>
    %c20_44 = arith.constant 20 : index
    %c0_45 = arith.constant 0 : index
    %196 = vector.load %arg15[%c20_44, %c0_45] : memref<32x32xbf16, #tpu.memory_space<vmem>>, vector<4x32xbf16>
    tpu.vector_store %arg15[%c20_44, %c0_45], %195 {strides = array<i32>} : memref<32x32xbf16, #tpu.memory_space<vmem>>, vector<4x32xbf16>,
    %c24 = arith.constant 24 : index
    %c0_46 = arith.constant 0 : index
    %197 = vector.load %arg1[%c24, %c0_46] : memref<32x96xf32, #tpu.memory_space<vmem>>, vector<4x96xf32>
    %198 = arith.truncf %194 : vector<4x32xf32> to vector<4x32xbf16>
    %cst_47 = arith.constant dense<0.000000e+00> : vector<4x96xf32>
    %199 = tpu.matmul %198, %0, %cst_47 {dimension_numbers = #tpu.dot_dimension_numbers<[1], [0], [0], [1], [0, 0, 1, 1], [], []>} : vector<4x32xbf16>, vector<32x96xbf16>, vector<4x96xf32> -> vector<4x96xf32>
    %200 = arith.addf %199, %3 : vector<4x96xf32>
    %201 = vector.extract_strided_slice %197 {offsets = [0, 0], sizes = [4, 32], strides = [1, 1]} : vector<4x96xf32> to vector<4x32xf32>
    %202 = vector.extract_strided_slice %200 {offsets = [0, 0], sizes = [4, 32], strides = [1, 1]} : vector<4x96xf32> to vector<4x32xf32>
    %203 = arith.addf %201, %202 : vector<4x32xf32>
    %204 = arith.negf %203 : vector<4x32xf32>
    %205 = math.exp %204 : vector<4x32xf32>
    %cst_48 = arith.constant 1.000000e+00 : f32
    %206 = vector.broadcast %cst_48 : f32 to vector<4x32xf32>
    %207 = arith.addf %206, %205 : vector<4x32xf32>
    %208 = arith.divf %206, %207 : vector<4x32xf32>
    %209 = vector.extract_strided_slice %197 {offsets = [0, 32], sizes = [4, 32], strides = [1, 1]} : vector<4x96xf32> to vector<4x32xf32>
    %210 = vector.extract_strided_slice %200 {offsets = [0, 32], sizes = [4, 32], strides = [1, 1]} : vector<4x96xf32> to vector<4x32xf32>
    %211 = arith.addf %209, %210 : vector<4x32xf32>
    %212 = arith.negf %211 : vector<4x32xf32>
    %213 = math.exp %212 : vector<4x32xf32>
    %cst_49 = arith.constant 1.000000e+00 : f32
    %214 = vector.broadcast %cst_49 : f32 to vector<4x32xf32>
    %215 = arith.addf %214, %213 : vector<4x32xf32>
    %216 = arith.divf %214, %215 : vector<4x32xf32>
    %217 = vector.extract_strided_slice %197 {offsets = [0, 64], sizes = [4, 32], strides = [1, 1]} : vector<4x96xf32> to vector<4x32xf32>
    %218 = vector.extract_strided_slice %200 {offsets = [0, 64], sizes = [4, 32], strides = [1, 1]} : vector<4x96xf32> to vector<4x32xf32>
    %219 = arith.mulf %208, %218 : vector<4x32xf32>
    %220 = arith.addf %217, %219 : vector<4x32xf32>
    %221 = math.tanh %220 : vector<4x32xf32>
    %cst_50 = arith.constant 1.000000e+00 : f32
    %222 = vector.broadcast %cst_50 : f32 to vector<4x32xf32>
    %223 = arith.subf %222, %216 : vector<4x32xf32>
    %224 = arith.mulf %223, %221 : vector<4x32xf32>
    %225 = arith.mulf %216, %194 : vector<4x32xf32>
    %226 = arith.addf %224, %225 : vector<4x32xf32>
    %227 = arith.truncf %226 : vector<4x32xf32> to vector<4x32xbf16>
    %c24_51 = arith.constant 24 : index
    %c0_52 = arith.constant 0 : index
    %228 = vector.load %arg15[%c24_51, %c0_52] : memref<32x32xbf16, #tpu.memory_space<vmem>>, vector<4x32xbf16>
    tpu.vector_store %arg15[%c24_51, %c0_52], %227 {strides = array<i32>} : memref<32x32xbf16, #tpu.memory_space<vmem>>, vector<4x32xbf16>,
    %c28 = arith.constant 28 : index
    %c0_53 = arith.constant 0 : index
    %229 = vector.load %arg1[%c28, %c0_53] : memref<32x96xf32, #tpu.memory_space<vmem>>, vector<4x96xf32>
    %230 = arith.truncf %226 : vector<4x32xf32> to vector<4x32xbf16>
    %cst_54 = arith.constant dense<0.000000e+00> : vector<4x96xf32>
    %231 = tpu.matmul %230, %0, %cst_54 {dimension_numbers = #tpu.dot_dimension_numbers<[1], [0], [0], [1], [0, 0, 1, 1], [], []>} : vector<4x32xbf16>, vector<32x96xbf16>, vector<4x96xf32> -> vector<4x96xf32>
    %232 = arith.addf %231, %3 : vector<4x96xf32>
    %233 = vector.extract_strided_slice %229 {offsets = [0, 0], sizes = [4, 32], strides = [1, 1]} : vector<4x96xf32> to vector<4x32xf32>
    %234 = vector.extract_strided_slice %232 {offsets = [0, 0], sizes = [4, 32], strides = [1, 1]} : vector<4x96xf32> to vector<4x32xf32>
    %235 = arith.addf %233, %234 : vector<4x32xf32>
    %236 = arith.negf %235 : vector<4x32xf32>
    %237 = math.exp %236 : vector<4x32xf32>
    %cst_55 = arith.constant 1.000000e+00 : f32
    %238 = vector.broadcast %cst_55 : f32 to vector<4x32xf32>
    %239 = arith.addf %238, %237 : vector<4x32xf32>
    %240 = arith.divf %238, %239 : vector<4x32xf32>
    %241 = vector.extract_strided_slice %229 {offsets = [0, 32], sizes = [4, 32], strides = [1, 1]} : vector<4x96xf32> to vector<4x32xf32>
    %242 = vector.extract_strided_slice %232 {offsets = [0, 32], sizes = [4, 32], strides = [1, 1]} : vector<4x96xf32> to vector<4x32xf32>
    %243 = arith.addf %241, %242 : vector<4x32xf32>
    %244 = arith.negf %243 : vector<4x32xf32>
    %245 = math.exp %244 : vector<4x32xf32>
    %cst_56 = arith.constant 1.000000e+00 : f32
    %246 = vector.broadcast %cst_56 : f32 to vector<4x32xf32>
    %247 = arith.addf %246, %245 : vector<4x32xf32>
    %248 = arith.divf %246, %247 : vector<4x32xf32>
    %249 = vector.extract_strided_slice %229 {offsets = [0, 64], sizes = [4, 32], strides = [1, 1]} : vector<4x96xf32> to vector<4x32xf32>
    %250 = vector.extract_strided_slice %232 {offsets = [0, 64], sizes = [4, 32], strides = [1, 1]} : vector<4x96xf32> to vector<4x32xf32>
    %251 = arith.mulf %240, %250 : vector<4x32xf32>
    %252 = arith.addf %249, %251 : vector<4x32xf32>
    %253 = math.tanh %252 : vector<4x32xf32>
    %cst_57 = arith.constant 1.000000e+00 : f32
    %254 = vector.broadcast %cst_57 : f32 to vector<4x32xf32>
    %255 = arith.subf %254, %248 : vector<4x32xf32>
    %256 = arith.mulf %255, %253 : vector<4x32xf32>
    %257 = arith.mulf %248, %226 : vector<4x32xf32>
    %258 = arith.addf %256, %257 : vector<4x32xf32>
    %259 = arith.truncf %258 : vector<4x32xf32> to vector<4x32xbf16>
    %c28_58 = arith.constant 28 : index
    %c0_59 = arith.constant 0 : index
    %260 = vector.load %arg15[%c28_58, %c0_59] : memref<32x32xbf16, #tpu.memory_space<vmem>>, vector<4x32xbf16>
    tpu.vector_store %arg15[%c28_58, %c0_59], %259 {strides = array<i32>} : memref<32x32xbf16, #tpu.memory_space<vmem>>, vector<4x32xbf16>,
    %c0_60 = arith.constant 0 : index
    %c0_61 = arith.constant 0 : index
    %261 = vector.load %arg15[%c0_60, %c0_61] : memref<32x32xbf16, #tpu.memory_space<vmem>>, vector<32x32xbf16>
    %c0_62 = arith.constant 0 : index
    %c0_63 = arith.constant 0 : index
    %262 = vector.load %arg4[%c0_62, %c0_63] : memref<32x96xbf16, #tpu.memory_space<vmem>>, vector<32x96xbf16>
    %cst_64 = arith.constant dense<0.000000e+00> : vector<32x96xf32>
    %263 = tpu.matmul %261, %262, %cst_64 {dimension_numbers = #tpu.dot_dimension_numbers<[1], [0], [0], [1], [0, 0, 1, 1], [], []>} : vector<32x32xbf16>, vector<32x96xbf16>, vector<32x96xf32> -> vector<32x96xf32>
    %c0_65 = arith.constant 0 : index
    %c0_66 = arith.constant 0 : index
    %264 = vector.load %arg16[%c0_65, %c0_66] : memref<32x96xf32, #tpu.memory_space<vmem>>, vector<32x96xf32>
    tpu.vector_store %arg16[%c0_65, %c0_66], %263 {strides = array<i32>} : memref<32x96xf32, #tpu.memory_space<vmem>>, vector<32x96xf32>,
    %c0_67 = arith.constant 0 : index
    %c0_68 = arith.constant 0 : index
    %265 = vector.load %arg6[%c0_67, %c0_68] : memref<32x96xbf16, #tpu.memory_space<vmem>>, vector<32x96xbf16>
    %c0_69 = arith.constant 0 : index
    %c0_70 = arith.constant 0 : index
    %266 = vector.load %arg7[%c0_69, %c0_70] : memref<1x96xf32, #tpu.memory_space<vmem>>, vector<1x96xf32>
    %267 = vector.shape_cast %266 : vector<1x96xf32> to vector<1x96xf32>
    %268 = vector.broadcast %267 : vector<1x96xf32> to vector<4x96xf32>
    %c0_71 = arith.constant 0 : index
    %c0_72 = arith.constant 0 : index
    %269 = vector.load %arg5[%c0_71, %c0_72] : memref<1x32xf32, #tpu.memory_space<vmem>>, vector<1x32xf32>
    %270 = vector.shape_cast %269 : vector<1x32xf32> to vector<1x32xf32>
    %271 = vector.broadcast %270 : vector<1x32xf32> to vector<4x32xf32>
    %cst_73 = arith.constant 0.000000e+00 : f32
    %272 = vector.broadcast %cst_73 : f32 to vector<4x32xf32>
    %c0_74 = arith.constant 0 : index
    %c0_75 = arith.constant 0 : index
    %273 = vector.load %arg16[%c0_74, %c0_75] : memref<32x96xf32, #tpu.memory_space<vmem>>, vector<4x96xf32>
    %274 = arith.truncf %272 : vector<4x32xf32> to vector<4x32xbf16>
    %cst_76 = arith.constant dense<0.000000e+00> : vector<4x96xf32>
    %275 = tpu.matmul %274, %265, %cst_76 {dimension_numbers = #tpu.dot_dimension_numbers<[1], [0], [0], [1], [0, 0, 1, 1], [], []>} : vector<4x32xbf16>, vector<32x96xbf16>, vector<4x96xf32> -> vector<4x96xf32>
    %276 = arith.addf %275, %268 : vector<4x96xf32>
    %277 = vector.extract_strided_slice %273 {offsets = [0, 0], sizes = [4, 32], strides = [1, 1]} : vector<4x96xf32> to vector<4x32xf32>
    %278 = vector.extract_strided_slice %276 {offsets = [0, 0], sizes = [4, 32], strides = [1, 1]} : vector<4x96xf32> to vector<4x32xf32>
    %279 = arith.addf %277, %278 : vector<4x32xf32>
    %280 = arith.negf %279 : vector<4x32xf32>
    %281 = math.exp %280 : vector<4x32xf32>
    %cst_77 = arith.constant 1.000000e+00 : f32
    %282 = vector.broadcast %cst_77 : f32 to vector<4x32xf32>
    %283 = arith.addf %282, %281 : vector<4x32xf32>
    %284 = arith.divf %282, %283 : vector<4x32xf32>
    %285 = vector.extract_strided_slice %273 {offsets = [0, 32], sizes = [4, 32], strides = [1, 1]} : vector<4x96xf32> to vector<4x32xf32>
    %286 = vector.extract_strided_slice %276 {offsets = [0, 32], sizes = [4, 32], strides = [1, 1]} : vector<4x96xf32> to vector<4x32xf32>
    %287 = arith.addf %285, %286 : vector<4x32xf32>
    %288 = arith.negf %287 : vector<4x32xf32>
    %289 = math.exp %288 : vector<4x32xf32>
    %cst_78 = arith.constant 1.000000e+00 : f32
    %290 = vector.broadcast %cst_78 : f32 to vector<4x32xf32>
    %291 = arith.addf %290, %289 : vector<4x32xf32>
    %292 = arith.divf %290, %291 : vector<4x32xf32>
    %293 = vector.extract_strided_slice %273 {offsets = [0, 64], sizes = [4, 32], strides = [1, 1]} : vector<4x96xf32> to vector<4x32xf32>
    %294 = arith.addf %293, %271 : vector<4x32xf32>
    %295 = vector.extract_strided_slice %276 {offsets = [0, 64], sizes = [4, 32], strides = [1, 1]} : vector<4x96xf32> to vector<4x32xf32>
    %296 = arith.mulf %284, %295 : vector<4x32xf32>
    %297 = arith.addf %294, %296 : vector<4x32xf32>
    %298 = math.tanh %297 : vector<4x32xf32>
    %cst_79 = arith.constant 1.000000e+00 : f32
    %299 = vector.broadcast %cst_79 : f32 to vector<4x32xf32>
    %300 = arith.subf %299, %292 : vector<4x32xf32>
    %301 = arith.mulf %300, %298 : vector<4x32xf32>
    %302 = arith.mulf %292, %272 : vector<4x32xf32>
    %303 = arith.addf %301, %302 : vector<4x32xf32>
    %c4_80 = arith.constant 4 : index
    %c0_81 = arith.constant 0 : index
    %304 = vector.load %arg16[%c4_80, %c0_81] : memref<32x96xf32, #tpu.memory_space<vmem>>, vector<4x96xf32>
    %305 = arith.truncf %303 : vector<4x32xf32> to vector<4x32xbf16>
    %cst_82 = arith.constant dense<0.000000e+00> : vector<4x96xf32>
    %306 = tpu.matmul %305, %265, %cst_82 {dimension_numbers = #tpu.dot_dimension_numbers<[1], [0], [0], [1], [0, 0, 1, 1], [], []>} : vector<4x32xbf16>, vector<32x96xbf16>, vector<4x96xf32> -> vector<4x96xf32>
    %307 = arith.addf %306, %268 : vector<4x96xf32>
    %308 = vector.extract_strided_slice %304 {offsets = [0, 0], sizes = [4, 32], strides = [1, 1]} : vector<4x96xf32> to vector<4x32xf32>
    %309 = vector.extract_strided_slice %307 {offsets = [0, 0], sizes = [4, 32], strides = [1, 1]} : vector<4x96xf32> to vector<4x32xf32>
    %310 = arith.addf %308, %309 : vector<4x32xf32>
    %311 = arith.negf %310 : vector<4x32xf32>
    %312 = math.exp %311 : vector<4x32xf32>
    %cst_83 = arith.constant 1.000000e+00 : f32
    %313 = vector.broadcast %cst_83 : f32 to vector<4x32xf32>
    %314 = arith.addf %313, %312 : vector<4x32xf32>
    %315 = arith.divf %313, %314 : vector<4x32xf32>
    %316 = vector.extract_strided_slice %304 {offsets = [0, 32], sizes = [4, 32], strides = [1, 1]} : vector<4x96xf32> to vector<4x32xf32>
    %317 = vector.extract_strided_slice %307 {offsets = [0, 32], sizes = [4, 32], strides = [1, 1]} : vector<4x96xf32> to vector<4x32xf32>
    %318 = arith.addf %316, %317 : vector<4x32xf32>
    %319 = arith.negf %318 : vector<4x32xf32>
    %320 = math.exp %319 : vector<4x32xf32>
    %cst_84 = arith.constant 1.000000e+00 : f32
    %321 = vector.broadcast %cst_84 : f32 to vector<4x32xf32>
    %322 = arith.addf %321, %320 : vector<4x32xf32>
    %323 = arith.divf %321, %322 : vector<4x32xf32>
    %324 = vector.extract_strided_slice %304 {offsets = [0, 64], sizes = [4, 32], strides = [1, 1]} : vector<4x96xf32> to vector<4x32xf32>
    %325 = arith.addf %324, %271 : vector<4x32xf32>
    %326 = vector.extract_strided_slice %307 {offsets = [0, 64], sizes = [4, 32], strides = [1, 1]} : vector<4x96xf32> to vector<4x32xf32>
    %327 = arith.mulf %315, %326 : vector<4x32xf32>
    %328 = arith.addf %325, %327 : vector<4x32xf32>
    %329 = math.tanh %328 : vector<4x32xf32>
    %cst_85 = arith.constant 1.000000e+00 : f32
    %330 = vector.broadcast %cst_85 : f32 to vector<4x32xf32>
    %331 = arith.subf %330, %323 : vector<4x32xf32>
    %332 = arith.mulf %331, %329 : vector<4x32xf32>
    %333 = arith.mulf %323, %303 : vector<4x32xf32>
    %334 = arith.addf %332, %333 : vector<4x32xf32>
    %c8_86 = arith.constant 8 : index
    %c0_87 = arith.constant 0 : index
    %335 = vector.load %arg16[%c8_86, %c0_87] : memref<32x96xf32, #tpu.memory_space<vmem>>, vector<4x96xf32>
    %336 = arith.truncf %334 : vector<4x32xf32> to vector<4x32xbf16>
    %cst_88 = arith.constant dense<0.000000e+00> : vector<4x96xf32>
    %337 = tpu.matmul %336, %265, %cst_88 {dimension_numbers = #tpu.dot_dimension_numbers<[1], [0], [0], [1], [0, 0, 1, 1], [], []>} : vector<4x32xbf16>, vector<32x96xbf16>, vector<4x96xf32> -> vector<4x96xf32>
    %338 = arith.addf %337, %268 : vector<4x96xf32>
    %339 = vector.extract_strided_slice %335 {offsets = [0, 0], sizes = [4, 32], strides = [1, 1]} : vector<4x96xf32> to vector<4x32xf32>
    %340 = vector.extract_strided_slice %338 {offsets = [0, 0], sizes = [4, 32], strides = [1, 1]} : vector<4x96xf32> to vector<4x32xf32>
    %341 = arith.addf %339, %340 : vector<4x32xf32>
    %342 = arith.negf %341 : vector<4x32xf32>
    %343 = math.exp %342 : vector<4x32xf32>
    %cst_89 = arith.constant 1.000000e+00 : f32
    %344 = vector.broadcast %cst_89 : f32 to vector<4x32xf32>
    %345 = arith.addf %344, %343 : vector<4x32xf32>
    %346 = arith.divf %344, %345 : vector<4x32xf32>
    %347 = vector.extract_strided_slice %335 {offsets = [0, 32], sizes = [4, 32], strides = [1, 1]} : vector<4x96xf32> to vector<4x32xf32>
    %348 = vector.extract_strided_slice %338 {offsets = [0, 32], sizes = [4, 32], strides = [1, 1]} : vector<4x96xf32> to vector<4x32xf32>
    %349 = arith.addf %347, %348 : vector<4x32xf32>
    %350 = arith.negf %349 : vector<4x32xf32>
    %351 = math.exp %350 : vector<4x32xf32>
    %cst_90 = arith.constant 1.000000e+00 : f32
    %352 = vector.broadcast %cst_90 : f32 to vector<4x32xf32>
    %353 = arith.addf %352, %351 : vector<4x32xf32>
    %354 = arith.divf %352, %353 : vector<4x32xf32>
    %355 = vector.extract_strided_slice %335 {offsets = [0, 64], sizes = [4, 32], strides = [1, 1]} : vector<4x96xf32> to vector<4x32xf32>
    %356 = arith.addf %355, %271 : vector<4x32xf32>
    %357 = vector.extract_strided_slice %338 {offsets = [0, 64], sizes = [4, 32], strides = [1, 1]} : vector<4x96xf32> to vector<4x32xf32>
    %358 = arith.mulf %346, %357 : vector<4x32xf32>
    %359 = arith.addf %356, %358 : vector<4x32xf32>
    %360 = math.tanh %359 : vector<4x32xf32>
    %cst_91 = arith.constant 1.000000e+00 : f32
    %361 = vector.broadcast %cst_91 : f32 to vector<4x32xf32>
    %362 = arith.subf %361, %354 : vector<4x32xf32>
    %363 = arith.mulf %362, %360 : vector<4x32xf32>
    %364 = arith.mulf %354, %334 : vector<4x32xf32>
    %365 = arith.addf %363, %364 : vector<4x32xf32>
    %c12_92 = arith.constant 12 : index
    %c0_93 = arith.constant 0 : index
    %366 = vector.load %arg16[%c12_92, %c0_93] : memref<32x96xf32, #tpu.memory_space<vmem>>, vector<4x96xf32>
    %367 = arith.truncf %365 : vector<4x32xf32> to vector<4x32xbf16>
    %cst_94 = arith.constant dense<0.000000e+00> : vector<4x96xf32>
    %368 = tpu.matmul %367, %265, %cst_94 {dimension_numbers = #tpu.dot_dimension_numbers<[1], [0], [0], [1], [0, 0, 1, 1], [], []>} : vector<4x32xbf16>, vector<32x96xbf16>, vector<4x96xf32> -> vector<4x96xf32>
    %369 = arith.addf %368, %268 : vector<4x96xf32>
    %370 = vector.extract_strided_slice %366 {offsets = [0, 0], sizes = [4, 32], strides = [1, 1]} : vector<4x96xf32> to vector<4x32xf32>
    %371 = vector.extract_strided_slice %369 {offsets = [0, 0], sizes = [4, 32], strides = [1, 1]} : vector<4x96xf32> to vector<4x32xf32>
    %372 = arith.addf %370, %371 : vector<4x32xf32>
    %373 = arith.negf %372 : vector<4x32xf32>
    %374 = math.exp %373 : vector<4x32xf32>
    %cst_95 = arith.constant 1.000000e+00 : f32
    %375 = vector.broadcast %cst_95 : f32 to vector<4x32xf32>
    %376 = arith.addf %375, %374 : vector<4x32xf32>
    %377 = arith.divf %375, %376 : vector<4x32xf32>
    %378 = vector.extract_strided_slice %366 {offsets = [0, 32], sizes = [4, 32], strides = [1, 1]} : vector<4x96xf32> to vector<4x32xf32>
    %379 = vector.extract_strided_slice %369 {offsets = [0, 32], sizes = [4, 32], strides = [1, 1]} : vector<4x96xf32> to vector<4x32xf32>
    %380 = arith.addf %378, %379 : vector<4x32xf32>
    %381 = arith.negf %380 : vector<4x32xf32>
    %382 = math.exp %381 : vector<4x32xf32>
    %cst_96 = arith.constant 1.000000e+00 : f32
    %383 = vector.broadcast %cst_96 : f32 to vector<4x32xf32>
    %384 = arith.addf %383, %382 : vector<4x32xf32>
    %385 = arith.divf %383, %384 : vector<4x32xf32>
    %386 = vector.extract_strided_slice %366 {offsets = [0, 64], sizes = [4, 32], strides = [1, 1]} : vector<4x96xf32> to vector<4x32xf32>
    %387 = arith.addf %386, %271 : vector<4x32xf32>
    %388 = vector.extract_strided_slice %369 {offsets = [0, 64], sizes = [4, 32], strides = [1, 1]} : vector<4x96xf32> to vector<4x32xf32>
    %389 = arith.mulf %377, %388 : vector<4x32xf32>
    %390 = arith.addf %387, %389 : vector<4x32xf32>
    %391 = math.tanh %390 : vector<4x32xf32>
    %cst_97 = arith.constant 1.000000e+00 : f32
    %392 = vector.broadcast %cst_97 : f32 to vector<4x32xf32>
    %393 = arith.subf %392, %385 : vector<4x32xf32>
    %394 = arith.mulf %393, %391 : vector<4x32xf32>
    %395 = arith.mulf %385, %365 : vector<4x32xf32>
    %396 = arith.addf %394, %395 : vector<4x32xf32>
    %c16_98 = arith.constant 16 : index
    %c0_99 = arith.constant 0 : index
    %397 = vector.load %arg16[%c16_98, %c0_99] : memref<32x96xf32, #tpu.memory_space<vmem>>, vector<4x96xf32>
    %398 = arith.truncf %396 : vector<4x32xf32> to vector<4x32xbf16>
    %cst_100 = arith.constant dense<0.000000e+00> : vector<4x96xf32>
    %399 = tpu.matmul %398, %265, %cst_100 {dimension_numbers = #tpu.dot_dimension_numbers<[1], [0], [0], [1], [0, 0, 1, 1], [], []>} : vector<4x32xbf16>, vector<32x96xbf16>, vector<4x96xf32> -> vector<4x96xf32>
    %400 = arith.addf %399, %268 : vector<4x96xf32>
    %401 = vector.extract_strided_slice %397 {offsets = [0, 0], sizes = [4, 32], strides = [1, 1]} : vector<4x96xf32> to vector<4x32xf32>
    %402 = vector.extract_strided_slice %400 {offsets = [0, 0], sizes = [4, 32], strides = [1, 1]} : vector<4x96xf32> to vector<4x32xf32>
    %403 = arith.addf %401, %402 : vector<4x32xf32>
    %404 = arith.negf %403 : vector<4x32xf32>
    %405 = math.exp %404 : vector<4x32xf32>
    %cst_101 = arith.constant 1.000000e+00 : f32
    %406 = vector.broadcast %cst_101 : f32 to vector<4x32xf32>
    %407 = arith.addf %406, %405 : vector<4x32xf32>
    %408 = arith.divf %406, %407 : vector<4x32xf32>
    %409 = vector.extract_strided_slice %397 {offsets = [0, 32], sizes = [4, 32], strides = [1, 1]} : vector<4x96xf32> to vector<4x32xf32>
    %410 = vector.extract_strided_slice %400 {offsets = [0, 32], sizes = [4, 32], strides = [1, 1]} : vector<4x96xf32> to vector<4x32xf32>
    %411 = arith.addf %409, %410 : vector<4x32xf32>
    %412 = arith.negf %411 : vector<4x32xf32>
    %413 = math.exp %412 : vector<4x32xf32>
    %cst_102 = arith.constant 1.000000e+00 : f32
    %414 = vector.broadcast %cst_102 : f32 to vector<4x32xf32>
    %415 = arith.addf %414, %413 : vector<4x32xf32>
    %416 = arith.divf %414, %415 : vector<4x32xf32>
    %417 = vector.extract_strided_slice %397 {offsets = [0, 64], sizes = [4, 32], strides = [1, 1]} : vector<4x96xf32> to vector<4x32xf32>
    %418 = arith.addf %417, %271 : vector<4x32xf32>
    %419 = vector.extract_strided_slice %400 {offsets = [0, 64], sizes = [4, 32], strides = [1, 1]} : vector<4x96xf32> to vector<4x32xf32>
    %420 = arith.mulf %408, %419 : vector<4x32xf32>
    %421 = arith.addf %418, %420 : vector<4x32xf32>
    %422 = math.tanh %421 : vector<4x32xf32>
    %cst_103 = arith.constant 1.000000e+00 : f32
    %423 = vector.broadcast %cst_103 : f32 to vector<4x32xf32>
    %424 = arith.subf %423, %416 : vector<4x32xf32>
    %425 = arith.mulf %424, %422 : vector<4x32xf32>
    %426 = arith.mulf %416, %396 : vector<4x32xf32>
    %427 = arith.addf %425, %426 : vector<4x32xf32>
    %c20_104 = arith.constant 20 : index
    %c0_105 = arith.constant 0 : index
    %428 = vector.load %arg16[%c20_104, %c0_105] : memref<32x96xf32, #tpu.memory_space<vmem>>, vector<4x96xf32>
    %429 = arith.truncf %427 : vector<4x32xf32> to vector<4x32xbf16>
    %cst_106 = arith.constant dense<0.000000e+00> : vector<4x96xf32>
    %430 = tpu.matmul %429, %265, %cst_106 {dimension_numbers = #tpu.dot_dimension_numbers<[1], [0], [0], [1], [0, 0, 1, 1], [], []>} : vector<4x32xbf16>, vector<32x96xbf16>, vector<4x96xf32> -> vector<4x96xf32>
    %431 = arith.addf %430, %268 : vector<4x96xf32>
    %432 = vector.extract_strided_slice %428 {offsets = [0, 0], sizes = [4, 32], strides = [1, 1]} : vector<4x96xf32> to vector<4x32xf32>
    %433 = vector.extract_strided_slice %431 {offsets = [0, 0], sizes = [4, 32], strides = [1, 1]} : vector<4x96xf32> to vector<4x32xf32>
    %434 = arith.addf %432, %433 : vector<4x32xf32>
    %435 = arith.negf %434 : vector<4x32xf32>
    %436 = math.exp %435 : vector<4x32xf32>
    %cst_107 = arith.constant 1.000000e+00 : f32
    %437 = vector.broadcast %cst_107 : f32 to vector<4x32xf32>
    %438 = arith.addf %437, %436 : vector<4x32xf32>
    %439 = arith.divf %437, %438 : vector<4x32xf32>
    %440 = vector.extract_strided_slice %428 {offsets = [0, 32], sizes = [4, 32], strides = [1, 1]} : vector<4x96xf32> to vector<4x32xf32>
    %441 = vector.extract_strided_slice %431 {offsets = [0, 32], sizes = [4, 32], strides = [1, 1]} : vector<4x96xf32> to vector<4x32xf32>
    %442 = arith.addf %440, %441 : vector<4x32xf32>
    %443 = arith.negf %442 : vector<4x32xf32>
    %444 = math.exp %443 : vector<4x32xf32>
    %cst_108 = arith.constant 1.000000e+00 : f32
    %445 = vector.broadcast %cst_108 : f32 to vector<4x32xf32>
    %446 = arith.addf %445, %444 : vector<4x32xf32>
    %447 = arith.divf %445, %446 : vector<4x32xf32>
    %448 = vector.extract_strided_slice %428 {offsets = [0, 64], sizes = [4, 32], strides = [1, 1]} : vector<4x96xf32> to vector<4x32xf32>
    %449 = arith.addf %448, %271 : vector<4x32xf32>
    %450 = vector.extract_strided_slice %431 {offsets = [0, 64], sizes = [4, 32], strides = [1, 1]} : vector<4x96xf32> to vector<4x32xf32>
    %451 = arith.mulf %439, %450 : vector<4x32xf32>
    %452 = arith.addf %449, %451 : vector<4x32xf32>
    %453 = math.tanh %452 : vector<4x32xf32>
    %cst_109 = arith.constant 1.000000e+00 : f32
    %454 = vector.broadcast %cst_109 : f32 to vector<4x32xf32>
    %455 = arith.subf %454, %447 : vector<4x32xf32>
    %456 = arith.mulf %455, %453 : vector<4x32xf32>
    %457 = arith.mulf %447, %427 : vector<4x32xf32>
    %458 = arith.addf %456, %457 : vector<4x32xf32>
    %c24_110 = arith.constant 24 : index
    %c0_111 = arith.constant 0 : index
    %459 = vector.load %arg16[%c24_110, %c0_111] : memref<32x96xf32, #tpu.memory_space<vmem>>, vector<4x96xf32>
    %460 = arith.truncf %458 : vector<4x32xf32> to vector<4x32xbf16>
    %cst_112 = arith.constant dense<0.000000e+00> : vector<4x96xf32>
    %461 = tpu.matmul %460, %265, %cst_112 {dimension_numbers = #tpu.dot_dimension_numbers<[1], [0], [0], [1], [0, 0, 1, 1], [], []>} : vector<4x32xbf16>, vector<32x96xbf16>, vector<4x96xf32> -> vector<4x96xf32>
    %462 = arith.addf %461, %268 : vector<4x96xf32>
    %463 = vector.extract_strided_slice %459 {offsets = [0, 0], sizes = [4, 32], strides = [1, 1]} : vector<4x96xf32> to vector<4x32xf32>
    %464 = vector.extract_strided_slice %462 {offsets = [0, 0], sizes = [4, 32], strides = [1, 1]} : vector<4x96xf32> to vector<4x32xf32>
    %465 = arith.addf %463, %464 : vector<4x32xf32>
    %466 = arith.negf %465 : vector<4x32xf32>
    %467 = math.exp %466 : vector<4x32xf32>
    %cst_113 = arith.constant 1.000000e+00 : f32
    %468 = vector.broadcast %cst_113 : f32 to vector<4x32xf32>
    %469 = arith.addf %468, %467 : vector<4x32xf32>
    %470 = arith.divf %468, %469 : vector<4x32xf32>
    %471 = vector.extract_strided_slice %459 {offsets = [0, 32], sizes = [4, 32], strides = [1, 1]} : vector<4x96xf32> to vector<4x32xf32>
    %472 = vector.extract_strided_slice %462 {offsets = [0, 32], sizes = [4, 32], strides = [1, 1]} : vector<4x96xf32> to vector<4x32xf32>
    %473 = arith.addf %471, %472 : vector<4x32xf32>
    %474 = arith.negf %473 : vector<4x32xf32>
    %475 = math.exp %474 : vector<4x32xf32>
    %cst_114 = arith.constant 1.000000e+00 : f32
    %476 = vector.broadcast %cst_114 : f32 to vector<4x32xf32>
    %477 = arith.addf %476, %475 : vector<4x32xf32>
    %478 = arith.divf %476, %477 : vector<4x32xf32>
    %479 = vector.extract_strided_slice %459 {offsets = [0, 64], sizes = [4, 32], strides = [1, 1]} : vector<4x96xf32> to vector<4x32xf32>
    %480 = arith.addf %479, %271 : vector<4x32xf32>
    %481 = vector.extract_strided_slice %462 {offsets = [0, 64], sizes = [4, 32], strides = [1, 1]} : vector<4x96xf32> to vector<4x32xf32>
    %482 = arith.mulf %470, %481 : vector<4x32xf32>
    %483 = arith.addf %480, %482 : vector<4x32xf32>
    %484 = math.tanh %483 : vector<4x32xf32>
    %cst_115 = arith.constant 1.000000e+00 : f32
    %485 = vector.broadcast %cst_115 : f32 to vector<4x32xf32>
    %486 = arith.subf %485, %478 : vector<4x32xf32>
    %487 = arith.mulf %486, %484 : vector<4x32xf32>
    %488 = arith.mulf %478, %458 : vector<4x32xf32>
    %489 = arith.addf %487, %488 : vector<4x32xf32>
    %c28_116 = arith.constant 28 : index
    %c0_117 = arith.constant 0 : index
    %490 = vector.load %arg16[%c28_116, %c0_117] : memref<32x96xf32, #tpu.memory_space<vmem>>, vector<4x96xf32>
    %491 = arith.truncf %489 : vector<4x32xf32> to vector<4x32xbf16>
    %cst_118 = arith.constant dense<0.000000e+00> : vector<4x96xf32>
    %492 = tpu.matmul %491, %265, %cst_118 {dimension_numbers = #tpu.dot_dimension_numbers<[1], [0], [0], [1], [0, 0, 1, 1], [], []>} : vector<4x32xbf16>, vector<32x96xbf16>, vector<4x96xf32> -> vector<4x96xf32>
    %493 = arith.addf %492, %268 : vector<4x96xf32>
    %494 = vector.extract_strided_slice %490 {offsets = [0, 0], sizes = [4, 32], strides = [1, 1]} : vector<4x96xf32> to vector<4x32xf32>
    %495 = vector.extract_strided_slice %493 {offsets = [0, 0], sizes = [4, 32], strides = [1, 1]} : vector<4x96xf32> to vector<4x32xf32>
    %496 = arith.addf %494, %495 : vector<4x32xf32>
    %497 = arith.negf %496 : vector<4x32xf32>
    %498 = math.exp %497 : vector<4x32xf32>
    %cst_119 = arith.constant 1.000000e+00 : f32
    %499 = vector.broadcast %cst_119 : f32 to vector<4x32xf32>
    %500 = arith.addf %499, %498 : vector<4x32xf32>
    %501 = arith.divf %499, %500 : vector<4x32xf32>
    %502 = vector.extract_strided_slice %490 {offsets = [0, 32], sizes = [4, 32], strides = [1, 1]} : vector<4x96xf32> to vector<4x32xf32>
    %503 = vector.extract_strided_slice %493 {offsets = [0, 32], sizes = [4, 32], strides = [1, 1]} : vector<4x96xf32> to vector<4x32xf32>
    %504 = arith.addf %502, %503 : vector<4x32xf32>
    %505 = arith.negf %504 : vector<4x32xf32>
    %506 = math.exp %505 : vector<4x32xf32>
    %cst_120 = arith.constant 1.000000e+00 : f32
    %507 = vector.broadcast %cst_120 : f32 to vector<4x32xf32>
    %508 = arith.addf %507, %506 : vector<4x32xf32>
    %509 = arith.divf %507, %508 : vector<4x32xf32>
    %510 = vector.extract_strided_slice %490 {offsets = [0, 64], sizes = [4, 32], strides = [1, 1]} : vector<4x96xf32> to vector<4x32xf32>
    %511 = arith.addf %510, %271 : vector<4x32xf32>
    %512 = vector.extract_strided_slice %493 {offsets = [0, 64], sizes = [4, 32], strides = [1, 1]} : vector<4x96xf32> to vector<4x32xf32>
    %513 = arith.mulf %501, %512 : vector<4x32xf32>
    %514 = arith.addf %511, %513 : vector<4x32xf32>
    %515 = math.tanh %514 : vector<4x32xf32>
    %cst_121 = arith.constant 1.000000e+00 : f32
    %516 = vector.broadcast %cst_121 : f32 to vector<4x32xf32>
    %517 = arith.subf %516, %509 : vector<4x32xf32>
    %518 = arith.mulf %517, %515 : vector<4x32xf32>
    %519 = arith.mulf %509, %489 : vector<4x32xf32>
    %520 = arith.addf %518, %519 : vector<4x32xf32>
    %cst_122 = arith.constant dense<0.000000e+00> : vector<4xf32>
    %521 = vector.multi_reduction <add>, %258, %cst_122 [1] : vector<4x32xf32> to vector<4xf32>
    %522 = vector.shape_cast %521 : vector<4xf32> to vector<4x1xf32>
    %cst_123 = arith.constant 3.200000e+01 : f32
    %523 = vector.broadcast %cst_123 : f32 to vector<4x1xf32>
    %524 = arith.divf %522, %523 : vector<4x1xf32>
    %525 = vector.broadcast %524 : vector<4x1xf32> to vector<4x32xf32>
    %526 = arith.subf %258, %525 : vector<4x32xf32>
    %527 = arith.mulf %526, %526 : vector<4x32xf32>
    %cst_124 = arith.constant dense<0.000000e+00> : vector<4xf32>
    %528 = vector.multi_reduction <add>, %527, %cst_124 [1] : vector<4x32xf32> to vector<4xf32>
    %529 = vector.shape_cast %528 : vector<4xf32> to vector<4x1xf32>
    %cst_125 = arith.constant 3.200000e+01 : f32
    %530 = vector.broadcast %cst_125 : f32 to vector<4x1xf32>
    %531 = arith.divf %529, %530 : vector<4x1xf32>
    %532 = vector.broadcast %524 : vector<4x1xf32> to vector<4x32xf32>
    %533 = arith.subf %258, %532 : vector<4x32xf32>
    %cst_126 = arith.constant 9.99999974E-6 : f32
    %534 = vector.broadcast %cst_126 : f32 to vector<4x1xf32>
    %535 = arith.addf %531, %534 : vector<4x1xf32>
    %536 = math.rsqrt %535 : vector<4x1xf32>
    %537 = vector.broadcast %536 : vector<4x1xf32> to vector<4x32xf32>
    %538 = arith.mulf %533, %537 : vector<4x32xf32>
    %c0_127 = arith.constant 0 : index
    %c0_128 = arith.constant 0 : index
    %539 = vector.load %arg8[%c0_127, %c0_128] : memref<1x32xf32, #tpu.memory_space<vmem>>, vector<1x32xf32>
    %540 = vector.broadcast %539 : vector<1x32xf32> to vector<4x32xf32>
    %541 = arith.mulf %538, %540 : vector<4x32xf32>
    %c0_129 = arith.constant 0 : index
    %c0_130 = arith.constant 0 : index
    %542 = vector.load %arg10[%c0_129, %c0_130] : memref<1x32xf32, #tpu.memory_space<vmem>>, vector<1x32xf32>
    %543 = vector.broadcast %542 : vector<1x32xf32> to vector<4x32xf32>
    %544 = arith.addf %541, %543 : vector<4x32xf32>
    %cst_131 = arith.constant dense<0.000000e+00> : vector<4xf32>
    %545 = vector.multi_reduction <add>, %520, %cst_131 [1] : vector<4x32xf32> to vector<4xf32>
    %546 = vector.shape_cast %545 : vector<4xf32> to vector<4x1xf32>
    %cst_132 = arith.constant 3.200000e+01 : f32
    %547 = vector.broadcast %cst_132 : f32 to vector<4x1xf32>
    %548 = arith.divf %546, %547 : vector<4x1xf32>
    %549 = vector.broadcast %548 : vector<4x1xf32> to vector<4x32xf32>
    %550 = arith.subf %520, %549 : vector<4x32xf32>
    %551 = arith.mulf %550, %550 : vector<4x32xf32>
    %cst_133 = arith.constant dense<0.000000e+00> : vector<4xf32>
    %552 = vector.multi_reduction <add>, %551, %cst_133 [1] : vector<4x32xf32> to vector<4xf32>
    %553 = vector.shape_cast %552 : vector<4xf32> to vector<4x1xf32>
    %cst_134 = arith.constant 3.200000e+01 : f32
    %554 = vector.broadcast %cst_134 : f32 to vector<4x1xf32>
    %555 = arith.divf %553, %554 : vector<4x1xf32>
    %556 = vector.broadcast %548 : vector<4x1xf32> to vector<4x32xf32>
    %557 = arith.subf %520, %556 : vector<4x32xf32>
    %cst_135 = arith.constant 9.99999974E-6 : f32
    %558 = vector.broadcast %cst_135 : f32 to vector<4x1xf32>
    %559 = arith.addf %555, %558 : vector<4x1xf32>
    %560 = math.rsqrt %559 : vector<4x1xf32>
    %561 = vector.broadcast %560 : vector<4x1xf32> to vector<4x32xf32>
    %562 = arith.mulf %557, %561 : vector<4x32xf32>
    %c0_136 = arith.constant 0 : index
    %c0_137 = arith.constant 0 : index
    %563 = vector.load %arg9[%c0_136, %c0_137] : memref<1x32xf32, #tpu.memory_space<vmem>>, vector<1x32xf32>
    %564 = vector.broadcast %563 : vector<1x32xf32> to vector<4x32xf32>
    %565 = arith.mulf %562, %564 : vector<4x32xf32>
    %c0_138 = arith.constant 0 : index
    %c0_139 = arith.constant 0 : index
    %566 = vector.load %arg11[%c0_138, %c0_139] : memref<1x32xf32, #tpu.memory_space<vmem>>, vector<1x32xf32>
    %567 = vector.broadcast %566 : vector<1x32xf32> to vector<4x32xf32>
    %568 = arith.addf %565, %567 : vector<4x32xf32>
    %569 = tpu.concatenate %544, %568 in 1 : vector<4x32xf32>, vector<4x32xf32> -> vector<4x64xf32>
    %570 = arith.truncf %569 : vector<4x64xf32> to vector<4x64xbf16>
    %c0_140 = arith.constant 0 : index
    %c0_141 = arith.constant 0 : index
    %571 = vector.load %arg12[%c0_140, %c0_141] : memref<64x128xbf16, #tpu.memory_space<vmem>>, vector<64x128xbf16>
    %cst_142 = arith.constant dense<0.000000e+00> : vector<4x128xf32>
    %572 = tpu.matmul %570, %571, %cst_142 {dimension_numbers = #tpu.dot_dimension_numbers<[1], [0], [0], [1], [0, 0, 1, 1], [], []>} : vector<4x64xbf16>, vector<64x128xbf16>, vector<4x128xf32> -> vector<4x128xf32>
    %c0_143 = arith.constant 0 : index
    %c0_144 = arith.constant 0 : index
    %573 = vector.load %arg13[%c0_143, %c0_144] : memref<1x128xf32, #tpu.memory_space<vmem>>, vector<1x128xf32>
    %574 = vector.broadcast %573 : vector<1x128xf32> to vector<4x128xf32>
    %575 = arith.addf %572, %574 : vector<4x128xf32>
    %c0_145 = arith.constant 0 : index
    %c0_146 = arith.constant 0 : index
    %576 = vector.load %arg14[%c0_145, %c0_146] : memref<4x128xf32, #tpu.memory_space<vmem>>, vector<4x128xf32>
    tpu.vector_store %arg14[%c0_145, %c0_146], %575 {strides = array<i32>} : memref<4x128xf32, #tpu.memory_space<vmem>>, vector<4x128xf32>,
    return
  }
  func.func @transform_0(%arg0: i32) -> (i32, i32) {
    %c0_i32 = arith.constant 0 : i32
    %c0_i32_0 = arith.constant 0 : i32
    return %arg0, %c0_i32 : i32, i32
  }
  func.func @transform_1(%arg0: i32) -> (i32, i32) {
    %c0_i32 = arith.constant 0 : i32
    %c0_i32_0 = arith.constant 0 : i32
    %c0_i32_1 = arith.constant 0 : i32
    return %c0_i32, %c0_i32_0 : i32, i32
  }
  func.func @transform_2(%arg0: i32) -> (i32, i32) {
    %c0_i32 = arith.constant 0 : i32
    %c0_i32_0 = arith.constant 0 : i32
    %c0_i32_1 = arith.constant 0 : i32
    return %c0_i32, %c0_i32_0 : i32, i32
  }
  func.func @transform_3(%arg0: i32) -> (i32, i32) {
    %c0_i32 = arith.constant 0 : i32
    %c0_i32_0 = arith.constant 0 : i32
    %c0_i32_1 = arith.constant 0 : i32
    return %c0_i32, %c0_i32_0 : i32, i32
  }
  func.func @transform_4(%arg0: i32) -> (i32, i32) {
    %c0_i32 = arith.constant 0 : i32
    %c0_i32_0 = arith.constant 0 : i32
    %c0_i32_1 = arith.constant 0 : i32
    return %c0_i32, %c0_i32_0 : i32, i32
  }
  func.func @transform_5(%arg0: i32) -> (i32, i32) {
    %c0_i32 = arith.constant 0 : i32
    %c0_i32_0 = arith.constant 0 : i32
    %c0_i32_1 = arith.constant 0 : i32
    return %c0_i32, %c0_i32_0 : i32, i32
  }
  func.func @transform_6(%arg0: i32) -> (i32, i32) {
    %c0_i32 = arith.constant 0 : i32
    %c0_i32_0 = arith.constant 0 : i32
    %c0_i32_1 = arith.constant 0 : i32
    return %c0_i32, %c0_i32_0 : i32, i32
  }
  func.func @transform_7(%arg0: i32) -> (i32, i32) {
    %c0_i32 = arith.constant 0 : i32
    %c0_i32_0 = arith.constant 0 : i32
    %c0_i32_1 = arith.constant 0 : i32
    return %c0_i32, %c0_i32_0 : i32, i32
  }
  func.func @transform_8(%arg0: i32) -> (i32, i32) {
    %c0_i32 = arith.constant 0 : i32
    %c0_i32_0 = arith.constant 0 : i32
    %c0_i32_1 = arith.constant 0 : i32
    return %c0_i32, %c0_i32_0 : i32, i32
  }
  func.func @transform_9(%arg0: i32) -> (i32, i32) {
    %c0_i32 = arith.constant 0 : i32
    %c0_i32_0 = arith.constant 0 : i32
    %c0_i32_1 = arith.constant 0 : i32
    return %c0_i32, %c0_i32_0 : i32, i32
  }
  func.func @transform_10(%arg0: i32) -> (i32, i32) {
    %c0_i32 = arith.constant 0 : i32
    %c0_i32_0 = arith.constant 0 : i32
    %c0_i32_1 = arith.constant 0 : i32
    return %c0_i32, %c0_i32_0 : i32, i32
  }
  func.func @transform_11(%arg0: i32) -> (i32, i32) {
    %c0_i32 = arith.constant 0 : i32
    %c0_i32_0 = arith.constant 0 : i32
    %c0_i32_1 = arith.constant 0 : i32
    return %c0_i32, %c0_i32_0 : i32, i32
  }
  func.func @transform_12(%arg0: i32) -> (i32, i32) {
    %c0_i32 = arith.constant 0 : i32
    %c0_i32_0 = arith.constant 0 : i32
    %c0_i32_1 = arith.constant 0 : i32
    return %c0_i32, %c0_i32_0 : i32, i32
  }
  func.func @transform_13(%arg0: i32) -> (i32, i32) {
    %c0_i32 = arith.constant 0 : i32
    %c0_i32_0 = arith.constant 0 : i32
    return %arg0, %c0_i32 : i32, i32
  }
}

</mosaic_0001>

<llo_original>
// kernel: encoder_forward.1
$region0: #{encoder_forward.1}
  #allocation0 [shape = 'u32[]', space=smem, size = 0x4, offset = 0x4, fixed_abs, tag = 'smem constant byte address 0x4 - core index']
  #allocation1 [shape = 'u32[144,128]{1,0:T(1,128)}', space=vmem, size = 0x12000, scoped, tag = 'internal scratch']
  #allocation2 [shape = 'bf16[32,32]{1,0:T(16,128)(2,1)}', space=vmem, size = 0x2000, scoped, tag = 'scratch operand']
  #allocation3 [shape = 'f32[32,96]{1,0:T(8,128)}', space=vmem, size = 0x4000, scoped, tag = 'scratch operand']
  %s0 = inlined_call_operand.vmem [shape: f32[32,96], index: 0, kind: input, shape index: {}]
  %s1 = inlined_call_operand.vmem [shape: bf16[32,96], index: 1, kind: input, shape index: {}]
  %s2 = inlined_call_operand.vmem [shape: f32[1,96], index: 2, kind: input, shape index: {}]
  %s3 = inlined_call_operand.vmem [shape: bf16[32,96], index: 3, kind: input, shape index: {}]
  %s4 = inlined_call_operand.vmem [shape: f32[1,32], index: 4, kind: input, shape index: {}]
  %s5 = inlined_call_operand.vmem [shape: bf16[32,96], index: 5, kind: input, shape index: {}]
  %s6 = inlined_call_operand.vmem [shape: f32[1,96], index: 6, kind: input, shape index: {}]
  %s7 = inlined_call_operand.vmem [shape: f32[1,32], index: 7, kind: input, shape index: {}]
  %s8 = inlined_call_operand.vmem [shape: f32[1,32], index: 8, kind: input, shape index: {}]
  %s9 = inlined_call_operand.vmem [shape: f32[1,32], index: 9, kind: input, shape index: {}]
  %s10 = inlined_call_operand.vmem [shape: f32[1,32], index: 10, kind: input, shape index: {}]
  %s11 = inlined_call_operand.vmem [shape: bf16[64,128], index: 11, kind: input, shape index: {}]
  %s12 = inlined_call_operand.vmem [shape: f32[1,128], index: 12, kind: input, shape index: {}]
  %s13 = inlined_call_operand.vmem [shape: f32[4,128], index: 13, kind: output, shape index: {}]
  %s14 = sld [smem:[#allocation0]]
  $region62: #{encoder_forward.1} parent=0
    _
  %s16 = ssub.s32 1, %s14
  %s17 = scalar_select 0, %s16, %s14
  // Predicated region
  $region2: #{encoder_forward.1} parent=0 // pred_check
    _
  $region3: #{encoder_forward.1} parent=0 // pred_check_branch
    %19 = sbr.rel (0) target = $region5
  $region4: #{encoder_forward.1} parent=0 // pred_region
    _
  $region5: #{encoder_forward.1} parent=0 // pred_fallthru
    _
  // Predicated region
  $region6: #{encoder_forward.1} parent=0 // pred_check
    _
  $region7: #{encoder_forward.1} parent=0 // pred_check_branch
    %21 = sbr.rel (0) target = $region9
  $region8: #{encoder_forward.1} parent=0 // pred_region
    _
  $region9: #{encoder_forward.1} parent=0 // pred_fallthru
    _
  // Predicated region
  $region10: #{encoder_forward.1} parent=0 // pred_check
    _
  $region11: #{encoder_forward.1} parent=0 // pred_check_branch
    %23 = sbr.rel (0) target = $region13
  $region12: #{encoder_forward.1} parent=0 // pred_region
    _
  $region13: #{encoder_forward.1} parent=0 // pred_fallthru
    _
  // Predicated region
  $region14: #{encoder_forward.1} parent=0 // pred_check
    _
  $region15: #{encoder_forward.1} parent=0 // pred_check_branch
    %25 = sbr.rel (0) target = $region17
  $region16: #{encoder_forward.1} parent=0 // pred_region
    _
  $region17: #{encoder_forward.1} parent=0 // pred_fallthru
    _
  // Predicated region
  $region18: #{encoder_forward.1} parent=0 // pred_check
    _
  $region19: #{encoder_forward.1} parent=0 // pred_check_branch
    %27 = sbr.rel (0) target = $region21
  $region20: #{encoder_forward.1} parent=0 // pred_region
    _
  $region21: #{encoder_forward.1} parent=0 // pred_fallthru
    _
  // Predicated region
  $region22: #{encoder_forward.1} parent=0 // pred_check
    _
  $region23: #{encoder_forward.1} parent=0 // pred_check_branch
    %29 = sbr.rel (0) target = $region25
  $region24: #{encoder_forward.1} parent=0 // pred_region
    _
  $region25: #{encoder_forward.1} parent=0 // pred_fallthru
    _
  // Predicated region
  $region26: #{encoder_forward.1} parent=0 // pred_check
    _
  $region27: #{encoder_forward.1} parent=0 // pred_check_branch
    %31 = sbr.rel (0) target = $region29
  $region28: #{encoder_forward.1} parent=0 // pred_region
    _
  $region29: #{encoder_forward.1} parent=0 // pred_fallthru
    _
  // Predicated region
  $region30: #{encoder_forward.1} parent=0 // pred_check
    _
  $region31: #{encoder_forward.1} parent=0 // pred_check_branch
    %33 = sbr.rel (0) target = $region33
  $region32: #{encoder_forward.1} parent=0 // pred_region
    _
  $region33: #{encoder_forward.1} parent=0 // pred_fallthru
    _
  // Predicated region
  $region34: #{encoder_forward.1} parent=0 // pred_check
    _
  $region35: #{encoder_forward.1} parent=0 // pred_check_branch
    %35 = sbr.rel (0) target = $region37
  $region36: #{encoder_forward.1} parent=0 // pred_region
    _
  $region37: #{encoder_forward.1} parent=0 // pred_fallthru
    _
  // Predicated region
  $region38: #{encoder_forward.1} parent=0 // pred_check
    _
  $region39: #{encoder_forward.1} parent=0 // pred_check_branch
    %37 = sbr.rel (0) target = $region41
  $region40: #{encoder_forward.1} parent=0 // pred_region
    _
  $region41: #{encoder_forward.1} parent=0 // pred_fallthru
    _
  // Predicated region
  $region42: #{encoder_forward.1} parent=0 // pred_check
    _
  $region43: #{encoder_forward.1} parent=0 // pred_check_branch
    %39 = sbr.rel (0) target = $region45
  $region44: #{encoder_forward.1} parent=0 // pred_region
    _
  $region45: #{encoder_forward.1} parent=0 // pred_fallthru
    _
  // Predicated region
  $region46: #{encoder_forward.1} parent=0 // pred_check
    _
  $region47: #{encoder_forward.1} parent=0 // pred_check_branch
    %41 = sbr.rel (0) target = $region49
  $region48: #{encoder_forward.1} parent=0 // pred_region
    _
  $region49: #{encoder_forward.1} parent=0 // pred_fallthru
    _
  // Predicated region
  $region50: #{encoder_forward.1} parent=0 // pred_check
    _
  $region51: #{encoder_forward.1} parent=0 // pred_check_branch
    %43 = sbr.rel (0) target = $region53
  $region52: #{encoder_forward.1} parent=0 // pred_region
    _
  $region53: #{encoder_forward.1} parent=0 // pred_fallthru
    _
  %v45 = vld [vmem:[%s1] sm:$0xf]
  %v46 = vld [vmem:[%s1 + $0x4] sm:$0xf]
  %v47 = vld [vmem:[%s1 + $0x8] sm:$0xf]
  %v48 = vld [vmem:[%s1 + $0xc] sm:$0xf]
  %v49 = vld [vmem:[%s2] sm:$0x1]
  %v51 = vlaneseq
  %v52 = vshrl.u32 %v51, 7
  %v53 = vsub.s32 0, %v52
  %v54 = vrot.slane %v49, %v53
  %v56 = vld [vmem:[%s0] sm:$0xf]
  %v61 = vunpack.c.l.b16 %v45
  %v62 = vunpack.c.l.b16 %v46
  %v63 = vunpack.c.l.b16 %v47
  %v64 = vunpack.c.l.b16 %v48
  %v65 = vpack.c.b16 %v62, %v61
  %v66 = vpack.c.b16 %v64, %v63
  %vm69 = vcmask 261120
  %v71 = vsel %vm69, 0, 0
  %73 = vmatprep.subr.bf16.mxu0 0
  %74 = vmatpush1.bf16.msra.mxu0 %v65
  %75 = vmatprep.subr.bf16.mxu0 0
  %76 = vmatpush1.bf16.msra.mxu0 %v66
  %77 = vmatprep.subr.bf16.mxu0 0
  %78 = vmatpush1.bf16.msra.mxu0 0
  %79 = vmatprep.subr.bf16.mxu0 0
  %80 = vmatpush1.bf16.msra.mxu0 0
  %81 = vmatprep.subr.bf16.mxu0 0
  %82 = vmatpush1.bf16.msra.mxu0 0
  %83 = vmatprep.subr.bf16.mxu0 0
  %84 = vmatpush1.bf16.msra.mxu0 0
  %85 = vmatprep.subr.bf16.mxu0 0
  %86 = vmatpush1.bf16.msra.mxu0 0
  %87 = vmatprep.subr.bf16.mxu0 0
  %88 = vmatpush1.bf16.msra.mxu0 0
  %89 = vmatprep.subr.bf16.mxu0 0
  %90 = vmatpush1.bf16.msra.mxu0 0
  %91 = vmatprep.subr.bf16.mxu0 0
  %92 = vmatpush1.bf16.msra.mxu0 0
  %93 = vmatprep.subr.bf16.mxu0 0
  %94 = vmatpush1.bf16.msra.mxu0 0
  %95 = vmatprep.subr.bf16.mxu0 0
  %96 = vmatpush1.bf16.msra.mxu0 0
  %97 = vmatprep.subr.bf16.mxu0 0
  %98 = vmatpush1.bf16.msra.mxu0 0
  %99 = vmatprep.subr.bf16.mxu0 0
  %100 = vmatpush1.bf16.msra.mxu0 0
  %101 = vmatprep.subr.bf16.mxu0 0
  %102 = vmatpush1.bf16.msra.mxu0 0
  %103 = vmatprep.subr.bf16.mxu0 0
  %104 = vmatpush1.bf16.msra.mxu0 0
  %105 = vmatprep.mubr.bf16.mxu0 0
  %106 = vmatmul.mubr.bf16.gmra.mrb[0].mxu0 %v71
  %v107 = vpop.f32.mrb[0].mxu0
  %v108 = vadd.f32 %v54, %v107
  %v109 = vpop.f32.mrb[0].mxu0
  %v110 = vpop.f32.mrb[0].mxu0
  %v111 = vpop.f32.mrb[0].mxu0
  %112 = vdwg.mxu0
  %v113 = vadd.f32 %v56, %v108
  %v114 = vxor.u32 %v113, 2147483648
  %v115 = vmul.f32 %v114, 1.442695
  %v116 = vpow.pop %v115
  %v117 = vadd.f32 %v116, 1.0
  %v118 = vrcp.pop %v117
  %v119 = vmul.f32 1.0, %v118
  %121 = vrot.lane.b32.xlu0 %v108, 64
  %v122 = vpop.permute.xlu0 %121
  %v124 = vmul.f32 %v119, %v122
  %126 = vrot.lane.b32.xlu0 %v124, 64
  %v127 = vpop.permute.xlu0 %126
  %v129 = vadd.f32 %v56, %v127
  %v130 = vtanh.pop %v129
  %v131 = vsub.f32 1.0, %v119
  %133 = vrot.lane.b32.xlu0 %v130, 96
  %v134 = vpop.permute.xlu0 %133
  %v136 = vmul.f32 %v131, %v134
  %v137 = vmul.f32 %v119, 0.0
  %v138 = vadd.f32 %v136, %v137
  %v139 = vpack.c.bf16 %v138, %v138
  %141 = vrot.lane.b32.xlu0 %v139, 96
  %v142 = vpop.permute.xlu0 %141
  %vm144 = vcmask 254976
  %145 = vst.msk [vmem:[#allocation2] sm:$0x3] %vm144, %v142
  %v146 = vld [vmem:[%s0 + $0x4] sm:$0xf]
  %v148 = vsel %vm69, %v142, 0
  %150 = vmatprep.subr.bf16.mxu0 0
  %151 = vmatpush1.bf16.msra.mxu0 %v65
  %152 = vmatprep.subr.bf16.mxu0 0
  %153 = vmatpush1.bf16.msra.mxu0 %v66
  %154 = vmatprep.subr.bf16.mxu0 0
  %155 = vmatpush1.bf16.msra.mxu0 0
  %156 = vmatprep.subr.bf16.mxu0 0
  %157 = vmatpush1.bf16.msra.mxu0 0
  %158 = vmatprep.subr.bf16.mxu0 0
  %159 = vmatpush1.bf16.msra.mxu0 0
  %160 = vmatprep.subr.bf16.mxu0 0
  %161 = vmatpush1.bf16.msra.mxu0 0
  %162 = vmatprep.subr.bf16.mxu0 0
  %163 = vmatpush1.bf16.msra.mxu0 0
  %164 = vmatprep.subr.bf16.mxu0 0
  %165 = vmatpush1.bf16.msra.mxu0 0
  %166 = vmatprep.subr.bf16.mxu0 0
  %167 = vmatpush1.bf16.msra.mxu0 0
  %168 = vmatprep.subr.bf16.mxu0 0
  %169 = vmatpush1.bf16.msra.mxu0 0
  %170 = vmatprep.subr.bf16.mxu0 0
  %171 = vmatpush1.bf16.msra.mxu0 0
  %172 = vmatprep.subr.bf16.mxu0 0
  %173 = vmatpush1.bf16.msra.mxu0 0
  %174 = vmatprep.subr.bf16.mxu0 0
  %175 = vmatpush1.bf16.msra.mxu0 0
  %176 = vmatprep.subr.bf16.mxu0 0
  %177 = vmatpush1.bf16.msra.mxu0 0
  %178 = vmatprep.subr.bf16.mxu0 0
  %179 = vmatpush1.bf16.msra.mxu0 0
  %180 = vmatprep.subr.bf16.mxu0 0
  %181 = vmatpush1.bf16.msra.mxu0 0
  %182 = vmatprep.mubr.bf16.mxu0 0
  %183 = vmatmul.mubr.bf16.gmra.mrb[0].mxu0 %v148
  %v184 = vpop.f32.mrb[0].mxu0
  %v185 = vadd.f32 %v54, %v184
  %v186 = vpop.f32.mrb[0].mxu0
  %v187 = vpop.f32.mrb[0].mxu0
  %v188 = vpop.f32.mrb[0].mxu0
  %189 = vdwg.mxu0
  %v190 = vadd.f32 %v146, %v185
  %v191 = vxor.u32 %v190, 2147483648
  %v192 = vmul.f32 %v191, 1.442695
  %v193 = vpow.pop %v192
  %v194 = vadd.f32 %v193, 1.0
  %v195 = vrcp.pop %v194
  %v196 = vmul.f32 1.0, %v195
  %198 = vrot.lane.b32.xlu0 %v185, 64
  %v199 = vpop.permute.xlu0 %198
  %v201 = vmul.f32 %v196, %v199
  %203 = vrot.lane.b32.xlu0 %v201, 64
  %v204 = vpop.permute.xlu0 %203
  %v206 = vadd.f32 %v146, %v204
  %v207 = vtanh.pop %v206
  %v208 = vsub.f32 1.0, %v196
  %210 = vrot.lane.b32.xlu0 %v207, 96
  %v211 = vpop.permute.xlu0 %210
  %v213 = vmul.f32 %v208, %v211
  %v214 = vmul.f32 %v196, %v138
  %v215 = vadd.f32 %v213, %v214
  %v216 = vpack.c.bf16 %v215, %v215
  %v218 = vrot.slane %v216, 6
  %219 = vrot.lane.b32.xlu0 %v218, 96
  %v220 = vpop.permute.xlu0 %219
  %vm222 = vcmask 257026
  %223 = vst.msk [vmem:[#allocation2] sm:$0xc] %vm222, %v220
  %v224 = vld [vmem:[%s0 + $0x8] sm:$0xf]
  %225 = vrot.lane.b32.xlu0 %v216, 96
  %v226 = vpop.permute.xlu0 %225
  %v228 = vsel %vm69, %v226, 0
  %230 = vmatprep.subr.bf16.mxu0 0
  %231 = vmatpush1.bf16.msra.mxu0 %v65
  %232 = vmatprep.subr.bf16.mxu0 0
  %233 = vmatpush1.bf16.msra.mxu0 %v66
  %234 = vmatprep.subr.bf16.mxu0 0
  %235 = vmatpush1.bf16.msra.mxu0 0
  %236 = vmatprep.subr.bf16.mxu0 0
  %237 = vmatpush1.bf16.msra.mxu0 0
  %238 = vmatprep.subr.bf16.mxu0 0
  %239 = vmatpush1.bf16.msra.mxu0 0
  %240 = vmatprep.subr.bf16.mxu0 0
  %241 = vmatpush1.bf16.msra.mxu0 0
  %242 = vmatprep.subr.bf16.mxu0 0
  %243 = vmatpush1.bf16.msra.mxu0 0
  %244 = vmatprep.subr.bf16.mxu0 0
  %245 = vmatpush1.bf16.msra.mxu0 0
  %246 = vmatprep.subr.bf16.mxu0 0
  %247 = vmatpush1.bf16.msra.mxu0 0
  %248 = vmatprep.subr.bf16.mxu0 0
  %249 = vmatpush1.bf16.msra.mxu0 0
  %250 = vmatprep.subr.bf16.mxu0 0
  %251 = vmatpush1.bf16.msra.mxu0 0
  %252 = vmatprep.subr.bf16.mxu0 0
  %253 = vmatpush1.bf16.msra.mxu0 0
  %254 = vmatprep.subr.bf16.mxu0 0
  %255 = vmatpush1.bf16.msra.mxu0 0
  %256 = vmatprep.subr.bf16.mxu0 0
  %257 = vmatpush1.bf16.msra.mxu0 0
  %258 = vmatprep.subr.bf16.mxu0 0
  %259 = vmatpush1.bf16.msra.mxu0 0
  %260 = vmatprep.subr.bf16.mxu0 0
  %261 = vmatpush1.bf16.msra.mxu0 0
  %262 = vmatprep.mubr.bf16.mxu0 0
  %263 = vmatmul.mubr.bf16.gmra.mrb[0].mxu0 %v228
  %v264 = vpop.f32.mrb[0].mxu0
  %v265 = vadd.f32 %v54, %v264
  %v266 = vpop.f32.mrb[0].mxu0
  %v267 = vpop.f32.mrb[0].mxu0
  %v268 = vpop.f32.mrb[0].mxu0
  %269 = vdwg.mxu0
  %v270 = vadd.f32 %v224, %v265
  %v271 = vxor.u32 %v270, 2147483648
  %v272 = vmul.f32 %v271, 1.442695
  %v273 = vpow.pop %v272
  %v274 = vadd.f32 %v273, 1.0
  %v275 = vrcp.pop %v274
  %v276 = vmul.f32 1.0, %v275
  %278 = vrot.lane.b32.xlu0 %v265, 64
  %v279 = vpop.permute.xlu0 %278
  %v281 = vmul.f32 %v276, %v279
  %283 = vrot.lane.b32.xlu0 %v281, 64
  %v284 = vpop.permute.xlu0 %283
  %v286 = vadd.f32 %v224, %v284
  %v287 = vtanh.pop %v286
  %v288 = vsub.f32 1.0, %v276
  %290 = vrot.lane.b32.xlu0 %v287, 96
  %v291 = vpop.permute.xlu0 %290
  %v293 = vmul.f32 %v288, %v291
  %v294 = vmul.f32 %v276, %v215
  %v295 = vadd.f32 %v293, %v294
  %v296 = vpack.c.bf16 %v295, %v295
  %v298 = vrot.slane %v296, 4
  %299 = vrot.lane.b32.xlu0 %v298, 96
  %v300 = vpop.permute.xlu0 %299
  %vm302 = vcmask 259076
  %303 = vst.msk [vmem:[#allocation2] sm:$0x30] %vm302, %v300
  %v304 = vld [vmem:[%s0 + $0xc] sm:$0xf]
  %305 = vrot.lane.b32.xlu0 %v296, 96
  %v306 = vpop.permute.xlu0 %305
  %v308 = vsel %vm69, %v306, 0
  %310 = vmatprep.subr.bf16.mxu0 0
  %311 = vmatpush1.bf16.msra.mxu0 %v65
  %312 = vmatprep.subr.bf16.mxu0 0
  %313 = vmatpush1.bf16.msra.mxu0 %v66
  %314 = vmatprep.subr.bf16.mxu0 0
  %315 = vmatpush1.bf16.msra.mxu0 0
  %316 = vmatprep.subr.bf16.mxu0 0
  %317 = vmatpush1.bf16.msra.mxu0 0
  %318 = vmatprep.subr.bf16.mxu0 0
  %319 = vmatpush1.bf16.msra.mxu0 0
  %320 = vmatprep.subr.bf16.mxu0 0
  %321 = vmatpush1.bf16.msra.mxu0 0
  %322 = vmatprep.subr.bf16.mxu0 0
  %323 = vmatpush1.bf16.msra.mxu0 0
  %324 = vmatprep.subr.bf16.mxu0 0
  %325 = vmatpush1.bf16.msra.mxu0 0
  %326 = vmatprep.subr.bf16.mxu0 0
  %327 = vmatpush1.bf16.msra.mxu0 0
  %328 = vmatprep.subr.bf16.mxu0 0
  %329 = vmatpush1.bf16.msra.mxu0 0
  %330 = vmatprep.subr.bf16.mxu0 0
  %331 = vmatpush1.bf16.msra.mxu0 0
  %332 = vmatprep.subr.bf16.mxu0 0
  %333 = vmatpush1.bf16.msra.mxu0 0
  %334 = vmatprep.subr.bf16.mxu0 0
  %335 = vmatpush1.bf16.msra.mxu0 0
  %336 = vmatprep.subr.bf16.mxu0 0
  %337 = vmatpush1.bf16.msra.mxu0 0
  %338 = vmatprep.subr.bf16.mxu0 0
  %339 = vmatpush1.bf16.msra.mxu0 0
  %340 = vmatprep.subr.bf16.mxu0 0
  %341 = vmatpush1.bf16.msra.mxu0 0
  %342 = vmatprep.mubr.bf16.mxu0 0
  %343 = vmatmul.mubr.bf16.gmra.mrb[0].mxu0 %v308
  %v344 = vpop.f32.mrb[0].mxu0
  %v345 = vadd.f32 %v54, %v344
  %v346 = vpop.f32.mrb[0].mxu0
  %v347 = vpop.f32.mrb[0].mxu0
  %v348 = vpop.f32.mrb[0].mxu0
  %349 = vdwg.mxu0
  %v350 = vadd.f32 %v304, %v345
  %v351 = vxor.u32 %v350, 2147483648
  %v352 = vmul.f32 %v351, 1.442695
  %v353 = vpow.pop %v352
  %v354 = vadd.f32 %v353, 1.0
  %v355 = vrcp.pop %v354
  %v356 = vmul.f32 1.0, %v355
  %358 = vrot.lane.b32.xlu0 %v345, 64
  %v359 = vpop.permute.xlu0 %358
  %v361 = vmul.f32 %v356, %v359
  %363 = vrot.lane.b32.xlu0 %v361, 64
  %v364 = vpop.permute.xlu0 %363
  %v366 = vadd.f32 %v304, %v364
  %v367 = vtanh.pop %v366
  %v368 = vsub.f32 1.0, %v356
  %370 = vrot.lane.b32.xlu0 %v367, 96
  %v371 = vpop.permute.xlu0 %370
  %v373 = vmul.f32 %v368, %v371
  %v374 = vmul.f32 %v356, %v295
  %v375 = vadd.f32 %v373, %v374
  %v376 = vpack.c.bf16 %v375, %v375
  %v378 = vrot.slane %v376, 2
  %379 = vrot.lane.b32.xlu0 %v378, 96
  %v380 = vpop.permute.xlu0 %379
  %vm382 = vcmask 261126
  %383 = vst.msk [vmem:[#allocation2] sm:$0xc0] %vm382, %v380
  %v384 = vld [vmem:[%s0 + $0x10] sm:$0xf]
  %385 = vrot.lane.b32.xlu0 %v376, 96
  %v386 = vpop.permute.xlu0 %385
  %v388 = vsel %vm69, %v386, 0
  %390 = vmatprep.subr.bf16.mxu0 0
  %391 = vmatpush1.bf16.msra.mxu0 %v65
  %392 = vmatprep.subr.bf16.mxu0 0
  %393 = vmatpush1.bf16.msra.mxu0 %v66
  %394 = vmatprep.subr.bf16.mxu0 0
  %395 = vmatpush1.bf16.msra.mxu0 0
  %396 = vmatprep.subr.bf16.mxu0 0
  %397 = vmatpush1.bf16.msra.mxu0 0
  %398 = vmatprep.subr.bf16.mxu0 0
  %399 = vmatpush1.bf16.msra.mxu0 0
  %400 = vmatprep.subr.bf16.mxu0 0
  %401 = vmatpush1.bf16.msra.mxu0 0
  %402 = vmatprep.subr.bf16.mxu0 0
  %403 = vmatpush1.bf16.msra.mxu0 0
  %404 = vmatprep.subr.bf16.mxu0 0
  %405 = vmatpush1.bf16.msra.mxu0 0
  %406 = vmatprep.subr.bf16.mxu0 0
  %407 = vmatpush1.bf16.msra.mxu0 0
  %408 = vmatprep.subr.bf16.mxu0 0
  %409 = vmatpush1.bf16.msra.mxu0 0
  %410 = vmatprep.subr.bf16.mxu0 0
  %411 = vmatpush1.bf16.msra.mxu0 0
  %412 = vmatprep.subr.bf16.mxu0 0
  %413 = vmatpush1.bf16.msra.mxu0 0
  %414 = vmatprep.subr.bf16.mxu0 0
  %415 = vmatpush1.bf16.msra.mxu0 0
  %416 = vmatprep.subr.bf16.mxu0 0
  %417 = vmatpush1.bf16.msra.mxu0 0
  %418 = vmatprep.subr.bf16.mxu0 0
  %419 = vmatpush1.bf16.msra.mxu0 0
  %420 = vmatprep.subr.bf16.mxu0 0
  %421 = vmatpush1.bf16.msra.mxu0 0
  %422 = vmatprep.mubr.bf16.mxu0 0
  %423 = vmatmul.mubr.bf16.gmra.mrb[0].mxu0 %v388
  %v424 = vpop.f32.mrb[0].mxu0
  %v425 = vadd.f32 %v54, %v424
  %v426 = vpop.f32.mrb[0].mxu0
  %v427 = vpop.f32.mrb[0].mxu0
  %v428 = vpop.f32.mrb[0].mxu0
  %429 = vdwg.mxu0
  %v430 = vadd.f32 %v384, %v425
  %v431 = vxor.u32 %v430, 2147483648
  %v432 = vmul.f32 %v431, 1.442695
  %v433 = vpow.pop %v432
  %v434 = vadd.f32 %v433, 1.0
  %v435 = vrcp.pop %v434
  %v436 = vmul.f32 1.0, %v435
  %438 = vrot.lane.b32.xlu0 %v425, 64
  %v439 = vpop.permute.xlu0 %438
  %v441 = vmul.f32 %v436, %v439
  %443 = vrot.lane.b32.xlu0 %v441, 64
  %v444 = vpop.permute.xlu0 %443
  %v446 = vadd.f32 %v384, %v444
  %v447 = vtanh.pop %v446
  %v448 = vsub.f32 1.0, %v436
  %450 = vrot.lane.b32.xlu0 %v447, 96
  %v451 = vpop.permute.xlu0 %450
  %v453 = vmul.f32 %v448, %v451
  %v454 = vmul.f32 %v436, %v375
  %v455 = vadd.f32 %v453, %v454
  %v456 = vpack.c.bf16 %v455, %v455
  %458 = vrot.lane.b32.xlu0 %v456, 96
  %v459 = vpop.permute.xlu0 %458
  %461 = vst.msk [vmem:[#allocation2 + $0x8] sm:$0x3] %vm144, %v459
  %v462 = vld [vmem:[%s0 + $0x14] sm:$0xf]
  %v464 = vsel %vm69, %v459, 0
  %466 = vmatprep.subr.bf16.mxu0 0
  %467 = vmatpush1.bf16.msra.mxu0 %v65
  %468 = vmatprep.subr.bf16.mxu0 0
  %469 = vmatpush1.bf16.msra.mxu0 %v66
  %470 = vmatprep.subr.bf16.mxu0 0
  %471 = vmatpush1.bf16.msra.mxu0 0
  %472 = vmatprep.subr.bf16.mxu0 0
  %473 = vmatpush1.bf16.msra.mxu0 0
  %474 = vmatprep.subr.bf16.mxu0 0
  %475 = vmatpush1.bf16.msra.mxu0 0
  %476 = vmatprep.subr.bf16.mxu0 0
  %477 = vmatpush1.bf16.msra.mxu0 0
  %478 = vmatprep.subr.bf16.mxu0 0
  %479 = vmatpush1.bf16.msra.mxu0 0
  %480 = vmatprep.subr.bf16.mxu0 0
  %481 = vmatpush1.bf16.msra.mxu0 0
  %482 = vmatprep.subr.bf16.mxu0 0
  %483 = vmatpush1.bf16.msra.mxu0 0
  %484 = vmatprep.subr.bf16.mxu0 0
  %485 = vmatpush1.bf16.msra.mxu0 0
  %486 = vmatprep.subr.bf16.mxu0 0
  %487 = vmatpush1.bf16.msra.mxu0 0
  %488 = vmatprep.subr.bf16.mxu0 0
  %489 = vmatpush1.bf16.msra.mxu0 0
  %490 = vmatprep.subr.bf16.mxu0 0
  %491 = vmatpush1.bf16.msra.mxu0 0
  %492 = vmatprep.subr.bf16.mxu0 0
  %493 = vmatpush1.bf16.msra.mxu0 0
  %494 = vmatprep.subr.bf16.mxu0 0
  %495 = vmatpush1.bf16.msra.mxu0 0
  %496 = vmatprep.subr.bf16.mxu0 0
  %497 = vmatpush1.bf16.msra.mxu0 0
  %498 = vmatprep.mubr.bf16.mxu0 0
  %499 = vmatmul.mubr.bf16.gmra.mrb[0].mxu0 %v464
  %v500 = vpop.f32.mrb[0].mxu0
  %v501 = vadd.f32 %v54, %v500
  %v502 = vpop.f32.mrb[0].mxu0
  %v503 = vpop.f32.mrb[0].mxu0
  %v504 = vpop.f32.mrb[0].mxu0
  %505 = vdwg.mxu0
  %v506 = vadd.f32 %v462, %v501
  %v507 = vxor.u32 %v506, 2147483648
  %v508 = vmul.f32 %v507, 1.442695
  %v509 = vpow.pop %v508
  %v510 = vadd.f32 %v509, 1.0
  %v511 = vrcp.pop %v510
  %v512 = vmul.f32 1.0, %v511
  %514 = vrot.lane.b32.xlu0 %v501, 64
  %v515 = vpop.permute.xlu0 %514
  %v517 = vmul.f32 %v512, %v515
  %519 = vrot.lane.b32.xlu0 %v517, 64
  %v520 = vpop.permute.xlu0 %519
  %v522 = vadd.f32 %v462, %v520
  %v523 = vtanh.pop %v522
  %v524 = vsub.f32 1.0, %v512
  %526 = vrot.lane.b32.xlu0 %v523, 96
  %v527 = vpop.permute.xlu0 %526
  %v529 = vmul.f32 %v524, %v527
  %v530 = vmul.f32 %v512, %v455
  %v531 = vadd.f32 %v529, %v530
  %v532 = vpack.c.bf16 %v531, %v531
  %v534 = vrot.slane %v532, 6
  %535 = vrot.lane.b32.xlu0 %v534, 96
  %v536 = vpop.permute.xlu0 %535
  %538 = vst.msk [vmem:[#allocation2 + $0x8] sm:$0xc] %vm222, %v536
  %v539 = vld [vmem:[%s0 + $0x18] sm:$0xf]
  %540 = vrot.lane.b32.xlu0 %v532, 96
  %v541 = vpop.permute.xlu0 %540
  %v543 = vsel %vm69, %v541, 0
  %545 = vmatprep.subr.bf16.mxu0 0
  %546 = vmatpush1.bf16.msra.mxu0 %v65
  %547 = vmatprep.subr.bf16.mxu0 0
  %548 = vmatpush1.bf16.msra.mxu0 %v66
  %549 = vmatprep.subr.bf16.mxu0 0
  %550 = vmatpush1.bf16.msra.mxu0 0
  %551 = vmatprep.subr.bf16.mxu0 0
  %552 = vmatpush1.bf16.msra.mxu0 0
  %553 = vmatprep.subr.bf16.mxu0 0
  %554 = vmatpush1.bf16.msra.mxu0 0
  %555 = vmatprep.subr.bf16.mxu0 0
  %556 = vmatpush1.bf16.msra.mxu0 0
  %557 = vmatprep.subr.bf16.mxu0 0
  %558 = vmatpush1.bf16.msra.mxu0 0
  %559 = vmatprep.subr.bf16.mxu0 0
  %560 = vmatpush1.bf16.msra.mxu0 0
  %561 = vmatprep.subr.bf16.mxu0 0
  %562 = vmatpush1.bf16.msra.mxu0 0
  %563 = vmatprep.subr.bf16.mxu0 0
  %564 = vmatpush1.bf16.msra.mxu0 0
  %565 = vmatprep.subr.bf16.mxu0 0
  %566 = vmatpush1.bf16.msra.mxu0 0
  %567 = vmatprep.subr.bf16.mxu0 0
  %568 = vmatpush1.bf16.msra.mxu0 0
  %569 = vmatprep.subr.bf16.mxu0 0
  %570 = vmatpush1.bf16.msra.mxu0 0
  %571 = vmatprep.subr.bf16.mxu0 0
  %572 = vmatpush1.bf16.msra.mxu0 0
  %573 = vmatprep.subr.bf16.mxu0 0
  %574 = vmatpush1.bf16.msra.mxu0 0
  %575 = vmatprep.subr.bf16.mxu0 0
  %576 = vmatpush1.bf16.msra.mxu0 0
  %577 = vmatprep.mubr.bf16.mxu0 0
  %578 = vmatmul.mubr.bf16.gmra.mrb[0].mxu0 %v543
  %v579 = vpop.f32.mrb[0].mxu0
  %v580 = vadd.f32 %v54, %v579
  %v581 = vpop.f32.mrb[0].mxu0
  %v582 = vpop.f32.mrb[0].mxu0
  %v583 = vpop.f32.mrb[0].mxu0
  %584 = vdwg.mxu0
  %v585 = vadd.f32 %v539, %v580
  %v586 = vxor.u32 %v585, 2147483648
  %v587 = vmul.f32 %v586, 1.442695
  %v588 = vpow.pop %v587
  %v589 = vadd.f32 %v588, 1.0
  %v590 = vrcp.pop %v589
  %v591 = vmul.f32 1.0, %v590
  %593 = vrot.lane.b32.xlu0 %v580, 64
  %v594 = vpop.permute.xlu0 %593
  %v596 = vmul.f32 %v591, %v594
  %598 = vrot.lane.b32.xlu0 %v596, 64
  %v599 = vpop.permute.xlu0 %598
  %v601 = vadd.f32 %v539, %v599
  %v602 = vtanh.pop %v601
  %v603 = vsub.f32 1.0, %v591
  %605 = vrot.lane.b32.xlu0 %v602, 96
  %v606 = vpop.permute.xlu0 %605
  %v608 = vmul.f32 %v603, %v606
  %v609 = vmul.f32 %v591, %v531
  %v610 = vadd.f32 %v608, %v609
  %v611 = vpack.c.bf16 %v610, %v610
  %v613 = vrot.slane %v611, 4
  %614 = vrot.lane.b32.xlu0 %v613, 96
  %v615 = vpop.permute.xlu0 %614
  %617 = vst.msk [vmem:[#allocation2 + $0x8] sm:$0x30] %vm302, %v615
  %v618 = vld [vmem:[%s0 + $0x1c] sm:$0xf]
  %619 = vrot.lane.b32.xlu0 %v611, 96
  %v620 = vpop.permute.xlu0 %619
  %v622 = vsel %vm69, %v620, 0
  %624 = vmatprep.subr.bf16.mxu0 0
  %625 = vmatpush1.bf16.msra.mxu0 %v65
  %626 = vmatprep.subr.bf16.mxu0 0
  %627 = vmatpush1.bf16.msra.mxu0 %v66
  %628 = vmatprep.subr.bf16.mxu0 0
  %629 = vmatpush1.bf16.msra.mxu0 0
  %630 = vmatprep.subr.bf16.mxu0 0
  %631 = vmatpush1.bf16.msra.mxu0 0
  %632 = vmatprep.subr.bf16.mxu0 0
  %633 = vmatpush1.bf16.msra.mxu0 0
  %634 = vmatprep.subr.bf16.mxu0 0
  %635 = vmatpush1.bf16.msra.mxu0 0
  %636 = vmatprep.subr.bf16.mxu0 0
  %637 = vmatpush1.bf16.msra.mxu0 0
  %638 = vmatprep.subr.bf16.mxu0 0
  %639 = vmatpush1.bf16.msra.mxu0 0
  %640 = vmatprep.subr.bf16.mxu0 0
  %641 = vmatpush1.bf16.msra.mxu0 0
  %642 = vmatprep.subr.bf16.mxu0 0
  %643 = vmatpush1.bf16.msra.mxu0 0
  %644 = vmatprep.subr.bf16.mxu0 0
  %645 = vmatpush1.bf16.msra.mxu0 0
  %646 = vmatprep.subr.bf16.mxu0 0
  %647 = vmatpush1.bf16.msra.mxu0 0
  %648 = vmatprep.subr.bf16.mxu0 0
  %649 = vmatpush1.bf16.msra.mxu0 0
  %650 = vmatprep.subr.bf16.mxu0 0
  %651 = vmatpush1.bf16.msra.mxu0 0
  %652 = vmatprep.subr.bf16.mxu0 0
  %653 = vmatpush1.bf16.msra.mxu0 0
  %654 = vmatprep.subr.bf16.mxu0 0
  %655 = vmatpush1.bf16.msra.mxu0 0
  %656 = vmatprep.mubr.bf16.mxu0 0
  %657 = vmatmul.mubr.bf16.gmra.mrb[0].mxu0 %v622
  %v658 = vpop.f32.mrb[0].mxu0
  %v659 = vadd.f32 %v54, %v658
  %v660 = vpop.f32.mrb[0].mxu0
  %v661 = vpop.f32.mrb[0].mxu0
  %v662 = vpop.f32.mrb[0].mxu0
  %663 = vdwg.mxu0
  %v664 = vadd.f32 %v618, %v659
  %v665 = vxor.u32 %v664, 2147483648
  %v666 = vmul.f32 %v665, 1.442695
  %v667 = vpow.pop %v666
  %v668 = vadd.f32 %v667, 1.0
  %v669 = vrcp.pop %v668
  %v670 = vmul.f32 1.0, %v669
  %672 = vrot.lane.b32.xlu0 %v659, 64
  %v673 = vpop.permute.xlu0 %672
  %v675 = vmul.f32 %v670, %v673
  %677 = vrot.lane.b32.xlu0 %v675, 64
  %v678 = vpop.permute.xlu0 %677
  %v680 = vadd.f32 %v618, %v678
  %v681 = vtanh.pop %v680
  %v682 = vsub.f32 1.0, %v670
  %684 = vrot.lane.b32.xlu0 %v681, 96
  %v685 = vpop.permute.xlu0 %684
  %v687 = vmul.f32 %v682, %v685
  %v688 = vmul.f32 %v670, %v610
  %v689 = vadd.f32 %v687, %v688
  %v690 = vpack.c.bf16 %v689, %v689
  %v692 = vrot.slane %v690, 2
  %693 = vrot.lane.b32.xlu0 %v692, 96
  %v694 = vpop.permute.xlu0 %693
  %696 = vst.msk [vmem:[#allocation2 + $0x8] sm:$0xc0] %vm382, %v694
  %v697 = vld [vmem:[#allocation2] sm:$0xff]
  %v698 = vld [vmem:[#allocation2 + $0x8] sm:$0xff]
  %v699 = vld [vmem:[%s3] sm:$0xf]
  %v700 = vld [vmem:[%s3 + $0x4] sm:$0xf]
  %v701 = vld [vmem:[%s3 + $0x8] sm:$0xf]
  %v702 = vld [vmem:[%s3 + $0xc] sm:$0xf]
  %v707 = vunpack.c.l.b16 %v699
  %v708 = vunpack.c.l.b16 %v700
  %v709 = vunpack.c.l.b16 %v701
  %v710 = vunpack.c.l.b16 %v702
  %v711 = vpack.c.b16 %v708, %v707
  %v712 = vpack.c.b16 %v710, %v709
  %v716 = vsel %vm69, %v697, 0
  %v719 = vsel %vm69, %v698, 0
  %721 = vmatprep.subr.bf16.mxu0 0
  %722 = vmatpush1.bf16.msra.mxu0 %v711
  %723 = vmatprep.subr.bf16.mxu0 0
  %724 = vmatpush1.bf16.msra.mxu0 %v712
  %725 = vmatprep.subr.bf16.mxu0 0
  %726 = vmatpush1.bf16.msra.mxu0 0
  %727 = vmatprep.subr.bf16.mxu0 0
  %728 = vmatpush1.bf16.msra.mxu0 0
  %729 = vmatprep.subr.bf16.mxu0 0
  %730 = vmatpush1.bf16.msra.mxu0 0
  %731 = vmatprep.subr.bf16.mxu0 0
  %732 = vmatpush1.bf16.msra.mxu0 0
  %733 = vmatprep.subr.bf16.mxu0 0
  %734 = vmatpush1.bf16.msra.mxu0 0
  %735 = vmatprep.subr.bf16.mxu0 0
  %736 = vmatpush1.bf16.msra.mxu0 0
  %737 = vmatprep.subr.bf16.mxu0 0
  %738 = vmatpush1.bf16.msra.mxu0 0
  %739 = vmatprep.subr.bf16.mxu0 0
  %740 = vmatpush1.bf16.msra.mxu0 0
  %741 = vmatprep.subr.bf16.mxu0 0
  %742 = vmatpush1.bf16.msra.mxu0 0
  %743 = vmatprep.subr.bf16.mxu0 0
  %744 = vmatpush1.bf16.msra.mxu0 0
  %745 = vmatprep.subr.bf16.mxu0 0
  %746 = vmatpush1.bf16.msra.mxu0 0
  %747 = vmatprep.subr.bf16.mxu0 0
  %748 = vmatpush1.bf16.msra.mxu0 0
  %749 = vmatprep.subr.bf16.mxu0 0
  %750 = vmatpush1.bf16.msra.mxu0 0
  %751 = vmatprep.subr.bf16.mxu0 0
  %752 = vmatpush1.bf16.msra.mxu0 0
  %753 = vmatprep.mubr.bf16.mxu0 0
  %754 = vmatmul.mubr.bf16.gmra.mrb[0].mxu0 %v716
  %v755 = vpop.f32.mrb[0].mxu0
  %v756 = vadd.f32 0.0, %v755
  %v757 = vpop.f32.mrb[0].mxu0
  %v758 = vpop.f32.mrb[0].mxu0
  %v759 = vadd.f32 0.0, %v758
  %v760 = vpop.f32.mrb[0].mxu0
  %761 = vmatprep.mubr.bf16.mxu0 0
  %762 = vmatmul.mubr.bf16.gmra.mrb[0].mxu0 %v719
  %v763 = vpop.f32.mrb[0].mxu0
  %v764 = vadd.f32 0.0, %v763
  %v765 = vpop.f32.mrb[0].mxu0
  %v766 = vpop.f32.mrb[0].mxu0
  %v767 = vadd.f32 0.0, %v766
  %v768 = vpop.f32.mrb[0].mxu0
  %769 = vdwg.mxu0
  %vm770 = vcmask 785408
  %771 = vst.msk [vmem:[#allocation3] sm:$0xff] %vm770, %v756
  %772 = vst.msk [vmem:[#allocation3 + $0x8] sm:$0xff] %vm770, %v759
  %773 = vst.msk [vmem:[#allocation3 + $0x10] sm:$0xff] %vm770, %v764
  %774 = vst.msk [vmem:[#allocation3 + $0x18] sm:$0xff] %vm770, %v767
  %v775 = vld [vmem:[%s5] sm:$0xf]
  %v776 = vld [vmem:[%s5 + $0x4] sm:$0xf]
  %v777 = vld [vmem:[%s5 + $0x8] sm:$0xf]
  %v778 = vld [vmem:[%s5 + $0xc] sm:$0xf]
  %v779 = vld [vmem:[%s6] sm:$0x1]
  %v781 = vlaneseq
  %v782 = vshrl.u32 %v781, 7
  %v783 = vsub.s32 0, %v782
  %v784 = vrot.slane %v779, %v783
  %v786 = vld [vmem:[%s4] sm:$0x1]
  %v788 = vlaneseq
  %v789 = vshrl.u32 %v788, 7
  %v790 = vsub.s32 0, %v789
  %v791 = vrot.slane %v786, %v790
  %v792 = vld [vmem:[#allocation3] sm:$0xf]
  %v797 = vunpack.c.l.b16 %v775
  %v798 = vunpack.c.l.b16 %v776
  %v799 = vunpack.c.l.b16 %v777
  %v800 = vunpack.c.l.b16 %v778
  %v801 = vpack.c.b16 %v798, %v797
  %v802 = vpack.c.b16 %v800, %v799
  %805 = vmatprep.subr.bf16.mxu0 0
  %806 = vmatpush1.bf16.msra.mxu0 %v801
  %807 = vmatprep.subr.bf16.mxu0 0
  %808 = vmatpush1.bf16.msra.mxu0 %v802
  %809 = vmatprep.subr.bf16.mxu0 0
  %810 = vmatpush1.bf16.msra.mxu0 0
  %811 = vmatprep.subr.bf16.mxu0 0
  %812 = vmatpush1.bf16.msra.mxu0 0
  %813 = vmatprep.subr.bf16.mxu0 0
  %814 = vmatpush1.bf16.msra.mxu0 0
  %815 = vmatprep.subr.bf16.mxu0 0
  %816 = vmatpush1.bf16.msra.mxu0 0
  %817 = vmatprep.subr.bf16.mxu0 0
  %818 = vmatpush1.bf16.msra.mxu0 0
  %819 = vmatprep.subr.bf16.mxu0 0
  %820 = vmatpush1.bf16.msra.mxu0 0
  %821 = vmatprep.subr.bf16.mxu0 0
  %822 = vmatpush1.bf16.msra.mxu0 0
  %823 = vmatprep.subr.bf16.mxu0 0
  %824 = vmatpush1.bf16.msra.mxu0 0
  %825 = vmatprep.subr.bf16.mxu0 0
  %826 = vmatpush1.bf16.msra.mxu0 0
  %827 = vmatprep.subr.bf16.mxu0 0
  %828 = vmatpush1.bf16.msra.mxu0 0
  %829 = vmatprep.subr.bf16.mxu0 0
  %830 = vmatpush1.bf16.msra.mxu0 0
  %831 = vmatprep.subr.bf16.mxu0 0
  %832 = vmatpush1.bf16.msra.mxu0 0
  %833 = vmatprep.subr.bf16.mxu0 0
  %834 = vmatpush1.bf16.msra.mxu0 0
  %835 = vmatprep.subr.bf16.mxu0 0
  %836 = vmatpush1.bf16.msra.mxu0 0
  %837 = vmatprep.mubr.bf16.mxu0 0
  %838 = vmatmul.mubr.bf16.gmra.mrb[0].mxu0 %v71
  %v839 = vpop.f32.mrb[0].mxu0
  %v840 = vadd.f32 %v784, %v839
  %v841 = vpop.f32.mrb[0].mxu0
  %v842 = vpop.f32.mrb[0].mxu0
  %v843 = vpop.f32.mrb[0].mxu0
  %844 = vdwg.mxu0
  %v845 = vadd.f32 %v792, %v840
  %v846 = vxor.u32 %v845, 2147483648
  %v847 = vmul.f32 %v846, 1.442695
  %v848 = vpow.pop %v847
  %v849 = vadd.f32 %v848, 1.0
  %v850 = vrcp.pop %v849
  %v851 = vmul.f32 1.0, %v850
  %852 = vrot.lane.b32.xlu0 %v791, 64
  %v853 = vpop.permute.xlu0 %852
  %v855 = vadd.f32 %v792, %v853
  %857 = vrot.lane.b32.xlu0 %v840, 64
  %v858 = vpop.permute.xlu0 %857
  %v860 = vmul.f32 %v851, %v858
  %862 = vrot.lane.b32.xlu0 %v860, 64
  %v863 = vpop.permute.xlu0 %862
  %v865 = vadd.f32 %v855, %v863
  %v866 = vtanh.pop %v865
  %v867 = vsub.f32 1.0, %v851
  %869 = vrot.lane.b32.xlu0 %v866, 96
  %v870 = vpop.permute.xlu0 %869
  %v872 = vmul.f32 %v867, %v870
  %v873 = vmul.f32 %v851, 0.0
  %v874 = vadd.f32 %v872, %v873
  %v875 = vld [vmem:[#allocation3 + $0x4] sm:$0xf]
  %v876 = vpack.c.bf16 %v874, %v874
  %878 = vrot.lane.b32.xlu0 %v876, 96
  %v879 = vpop.permute.xlu0 %878
  %v881 = vsel %vm69, %v879, 0
  %883 = vmatprep.subr.bf16.mxu0 0
  %884 = vmatpush1.bf16.msra.mxu0 %v801
  %885 = vmatprep.subr.bf16.mxu0 0
  %886 = vmatpush1.bf16.msra.mxu0 %v802
  %887 = vmatprep.subr.bf16.mxu0 0
  %888 = vmatpush1.bf16.msra.mxu0 0
  %889 = vmatprep.subr.bf16.mxu0 0
  %890 = vmatpush1.bf16.msra.mxu0 0
  %891 = vmatprep.subr.bf16.mxu0 0
  %892 = vmatpush1.bf16.msra.mxu0 0
  %893 = vmatprep.subr.bf16.mxu0 0
  %894 = vmatpush1.bf16.msra.mxu0 0
  %895 = vmatprep.subr.bf16.mxu0 0
  %896 = vmatpush1.bf16.msra.mxu0 0
  %897 = vmatprep.subr.bf16.mxu0 0
  %898 = vmatpush1.bf16.msra.mxu0 0
  %899 = vmatprep.subr.bf16.mxu0 0
  %900 = vmatpush1.bf16.msra.mxu0 0
  %901 = vmatprep.subr.bf16.mxu0 0
  %902 = vmatpush1.bf16.msra.mxu0 0
  %903 = vmatprep.subr.bf16.mxu0 0
  %904 = vmatpush1.bf16.msra.mxu0 0
  %905 = vmatprep.subr.bf16.mxu0 0
  %906 = vmatpush1.bf16.msra.mxu0 0
  %907 = vmatprep.subr.bf16.mxu0 0
  %908 = vmatpush1.bf16.msra.mxu0 0
  %909 = vmatprep.subr.bf16.mxu0 0
  %910 = vmatpush1.bf16.msra.mxu0 0
  %911 = vmatprep.subr.bf16.mxu0 0
  %912 = vmatpush1.bf16.msra.mxu0 0
  %913 = vmatprep.subr.bf16.mxu0 0
  %914 = vmatpush1.bf16.msra.mxu0 0
  %915 = vmatprep.mubr.bf16.mxu0 0
  %916 = vmatmul.mubr.bf16.gmra.mrb[0].mxu0 %v881
  %v917 = vpop.f32.mrb[0].mxu0
  %v918 = vadd.f32 %v784, %v917
  %v919 = vpop.f32.mrb[0].mxu0
  %v920 = vpop.f32.mrb[0].mxu0
  %v921 = vpop.f32.mrb[0].mxu0
  %922 = vdwg.mxu0
  %v923 = vadd.f32 %v875, %v918
  %v924 = vxor.u32 %v923, 2147483648
  %v925 = vmul.f32 %v924, 1.442695
  %v926 = vpow.pop %v925
  %v927 = vadd.f32 %v926, 1.0
  %v928 = vrcp.pop %v927
  %v929 = vmul.f32 1.0, %v928
  %v930 = vadd.f32 %v875, %v853
  %932 = vrot.lane.b32.xlu0 %v918, 64
  %v933 = vpop.permute.xlu0 %932
  %v935 = vmul.f32 %v929, %v933
  %937 = vrot.lane.b32.xlu0 %v935, 64
  %v938 = vpop.permute.xlu0 %937
  %v940 = vadd.f32 %v930, %v938
  %v941 = vtanh.pop %v940
  %v942 = vsub.f32 1.0, %v929
  %944 = vrot.lane.b32.xlu0 %v941, 96
  %v945 = vpop.permute.xlu0 %944
  %v947 = vmul.f32 %v942, %v945
  %v948 = vmul.f32 %v929, %v874
  %v949 = vadd.f32 %v947, %v948
  %v950 = vld [vmem:[#allocation3 + $0x8] sm:$0xf]
  %v951 = vpack.c.bf16 %v949, %v949
  %953 = vrot.lane.b32.xlu0 %v951, 96
  %v954 = vpop.permute.xlu0 %953
  %v956 = vsel %vm69, %v954, 0
  %958 = vmatprep.subr.bf16.mxu0 0
  %959 = vmatpush1.bf16.msra.mxu0 %v801
  %960 = vmatprep.subr.bf16.mxu0 0
  %961 = vmatpush1.bf16.msra.mxu0 %v802
  %962 = vmatprep.subr.bf16.mxu0 0
  %963 = vmatpush1.bf16.msra.mxu0 0
  %964 = vmatprep.subr.bf16.mxu0 0
  %965 = vmatpush1.bf16.msra.mxu0 0
  %966 = vmatprep.subr.bf16.mxu0 0
  %967 = vmatpush1.bf16.msra.mxu0 0
  %968 = vmatprep.subr.bf16.mxu0 0
  %969 = vmatpush1.bf16.msra.mxu0 0
  %970 = vmatprep.subr.bf16.mxu0 0
  %971 = vmatpush1.bf16.msra.mxu0 0
  %972 = vmatprep.subr.bf16.mxu0 0
  %973 = vmatpush1.bf16.msra.mxu0 0
  %974 = vmatprep.subr.bf16.mxu0 0
  %975 = vmatpush1.bf16.msra.mxu0 0
  %976 = vmatprep.subr.bf16.mxu0 0
  %977 = vmatpush1.bf16.msra.mxu0 0
  %978 = vmatprep.subr.bf16.mxu0 0
  %979 = vmatpush1.bf16.msra.mxu0 0
  %980 = vmatprep.subr.bf16.mxu0 0
  %981 = vmatpush1.bf16.msra.mxu0 0
  %982 = vmatprep.subr.bf16.mxu0 0
  %983 = vmatpush1.bf16.msra.mxu0 0
  %984 = vmatprep.subr.bf16.mxu0 0
  %985 = vmatpush1.bf16.msra.mxu0 0
  %986 = vmatprep.subr.bf16.mxu0 0
  %987 = vmatpush1.bf16.msra.mxu0 0
  %988 = vmatprep.subr.bf16.mxu0 0
  %989 = vmatpush1.bf16.msra.mxu0 0
  %990 = vmatprep.mubr.bf16.mxu0 0
  %991 = vmatmul.mubr.bf16.gmra.mrb[0].mxu0 %v956
  %v992 = vpop.f32.mrb[0].mxu0
  %v993 = vadd.f32 %v784, %v992
  %v994 = vpop.f32.mrb[0].mxu0
  %v995 = vpop.f32.mrb[0].mxu0
  %v996 = vpop.f32.mrb[0].mxu0
  %997 = vdwg.mxu0
  %v998 = vadd.f32 %v950, %v993
  %v999 = vxor.u32 %v998, 2147483648
  %v1000 = vmul.f32 %v999, 1.442695
  %v1001 = vpow.pop %v1000
  %v1002 = vadd.f32 %v1001, 1.0
  %v1003 = vrcp.pop %v1002
  %v1004 = vmul.f32 1.0, %v1003
  %v1005 = vadd.f32 %v950, %v853
  %1007 = vrot.lane.b32.xlu0 %v993, 64
  %v1008 = vpop.permute.xlu0 %1007
  %v1010 = vmul.f32 %v1004, %v1008
  %1012 = vrot.lane.b32.xlu0 %v1010, 64
  %v1013 = vpop.permute.xlu0 %1012
  %v1015 = vadd.f32 %v1005, %v1013
  %v1016 = vtanh.pop %v1015
  %v1017 = vsub.f32 1.0, %v1004
  %1019 = vrot.lane.b32.xlu0 %v1016, 96
  %v1020 = vpop.permute.xlu0 %1019
  %v1022 = vmul.f32 %v1017, %v1020
  %v1023 = vmul.f32 %v1004, %v949
  %v1024 = vadd.f32 %v1022, %v1023
  %v1025 = vld [vmem:[#allocation3 + $0xc] sm:$0xf]
  %v1026 = vpack.c.bf16 %v1024, %v1024
  %1028 = vrot.lane.b32.xlu0 %v1026, 96
  %v1029 = vpop.permute.xlu0 %1028
  %v1031 = vsel %vm69, %v1029, 0
  %1033 = vmatprep.subr.bf16.mxu0 0
  %1034 = vmatpush1.bf16.msra.mxu0 %v801
  %1035 = vmatprep.subr.bf16.mxu0 0
  %1036 = vmatpush1.bf16.msra.mxu0 %v802
  %1037 = vmatprep.subr.bf16.mxu0 0
  %1038 = vmatpush1.bf16.msra.mxu0 0
  %1039 = vmatprep.subr.bf16.mxu0 0
  %1040 = vmatpush1.bf16.msra.mxu0 0
  %1041 = vmatprep.subr.bf16.mxu0 0
  %1042 = vmatpush1.bf16.msra.mxu0 0
  %1043 = vmatprep.subr.bf16.mxu0 0
  %1044 = vmatpush1.bf16.msra.mxu0 0
  %1045 = vmatprep.subr.bf16.mxu0 0
  %1046 = vmatpush1.bf16.msra.mxu0 0
  %1047 = vmatprep.subr.bf16.mxu0 0
  %1048 = vmatpush1.bf16.msra.mxu0 0
  %1049 = vmatprep.subr.bf16.mxu0 0
  %1050 = vmatpush1.bf16.msra.mxu0 0
  %1051 = vmatprep.subr.bf16.mxu0 0
  %1052 = vmatpush1.bf16.msra.mxu0 0
  %1053 = vmatprep.subr.bf16.mxu0 0
  %1054 = vmatpush1.bf16.msra.mxu0 0
  %1055 = vmatprep.subr.bf16.mxu0 0
  %1056 = vmatpush1.bf16.msra.mxu0 0
  %1057 = vmatprep.subr.bf16.mxu0 0
  %1058 = vmatpush1.bf16.msra.mxu0 0
  %1059 = vmatprep.subr.bf16.mxu0 0
  %1060 = vmatpush1.bf16.msra.mxu0 0
  %1061 = vmatprep.subr.bf16.mxu0 0
  %1062 = vmatpush1.bf16.msra.mxu0 0
  %1063 = vmatprep.subr.bf16.mxu0 0
  %1064 = vmatpush1.bf16.msra.mxu0 0
  %1065 = vmatprep.mubr.bf16.mxu0 0
  %1066 = vmatmul.mubr.bf16.gmra.mrb[0].mxu0 %v1031
  %v1067 = vpop.f32.mrb[0].mxu0
  %v1068 = vadd.f32 %v784, %v1067
  %v1069 = vpop.f32.mrb[0].mxu0
  %v1070 = vpop.f32.mrb[0].mxu0
  %v1071 = vpop.f32.mrb[0].mxu0
  %1072 = vdwg.mxu0
  %v1073 = vadd.f32 %v1025, %v1068
  %v1074 = vxor.u32 %v1073, 2147483648
  %v1075 = vmul.f32 %v1074, 1.442695
  %v1076 = vpow.pop %v1075
  %v1077 = vadd.f32 %v1076, 1.0
  %v1078 = vrcp.pop %v1077
  %v1079 = vmul.f32 1.0, %v1078
  %v1080 = vadd.f32 %v1025, %v853
  %1082 = vrot.lane.b32.xlu0 %v1068, 64
  %v1083 = vpop.permute.xlu0 %1082
  %v1085 = vmul.f32 %v1079, %v1083
  %1087 = vrot.lane.b32.xlu0 %v1085, 64
  %v1088 = vpop.permute.xlu0 %1087
  %v1090 = vadd.f32 %v1080, %v1088
  %v1091 = vtanh.pop %v1090
  %v1092 = vsub.f32 1.0, %v1079
  %1094 = vrot.lane.b32.xlu0 %v1091, 96
  %v1095 = vpop.permute.xlu0 %1094
  %v1097 = vmul.f32 %v1092, %v1095
  %v1098 = vmul.f32 %v1079, %v1024
  %v1099 = vadd.f32 %v1097, %v1098
  %v1100 = vld [vmem:[#allocation3 + $0x10] sm:$0xf]
  %v1101 = vpack.c.bf16 %v1099, %v1099
  %1103 = vrot.lane.b32.xlu0 %v1101, 96
  %v1104 = vpop.permute.xlu0 %1103
  %v1106 = vsel %vm69, %v1104, 0
  %1108 = vmatprep.subr.bf16.mxu0 0
  %1109 = vmatpush1.bf16.msra.mxu0 %v801
  %1110 = vmatprep.subr.bf16.mxu0 0
  %1111 = vmatpush1.bf16.msra.mxu0 %v802
  %1112 = vmatprep.subr.bf16.mxu0 0
  %1113 = vmatpush1.bf16.msra.mxu0 0
  %1114 = vmatprep.subr.bf16.mxu0 0
  %1115 = vmatpush1.bf16.msra.mxu0 0
  %1116 = vmatprep.subr.bf16.mxu0 0
  %1117 = vmatpush1.bf16.msra.mxu0 0
  %1118 = vmatprep.subr.bf16.mxu0 0
  %1119 = vmatpush1.bf16.msra.mxu0 0
  %1120 = vmatprep.subr.bf16.mxu0 0
  %1121 = vmatpush1.bf16.msra.mxu0 0
  %1122 = vmatprep.subr.bf16.mxu0 0
  %1123 = vmatpush1.bf16.msra.mxu0 0
  %1124 = vmatprep.subr.bf16.mxu0 0
  %1125 = vmatpush1.bf16.msra.mxu0 0
  %1126 = vmatprep.subr.bf16.mxu0 0
  %1127 = vmatpush1.bf16.msra.mxu0 0
  %1128 = vmatprep.subr.bf16.mxu0 0
  %1129 = vmatpush1.bf16.msra.mxu0 0
  %1130 = vmatprep.subr.bf16.mxu0 0
  %1131 = vmatpush1.bf16.msra.mxu0 0
  %1132 = vmatprep.subr.bf16.mxu0 0
  %1133 = vmatpush1.bf16.msra.mxu0 0
  %1134 = vmatprep.subr.bf16.mxu0 0
  %1135 = vmatpush1.bf16.msra.mxu0 0
  %1136 = vmatprep.subr.bf16.mxu0 0
  %1137 = vmatpush1.bf16.msra.mxu0 0
  %1138 = vmatprep.subr.bf16.mxu0 0
  %1139 = vmatpush1.bf16.msra.mxu0 0
  %1140 = vmatprep.mubr.bf16.mxu0 0
  %1141 = vmatmul.mubr.bf16.gmra.mrb[0].mxu0 %v1106
  %v1142 = vpop.f32.mrb[0].mxu0
  %v1143 = vadd.f32 %v784, %v1142
  %v1144 = vpop.f32.mrb[0].mxu0
  %v1145 = vpop.f32.mrb[0].mxu0
  %v1146 = vpop.f32.mrb[0].mxu0
  %1147 = vdwg.mxu0
  %v1148 = vadd.f32 %v1100, %v1143
  %v1149 = vxor.u32 %v1148, 2147483648
  %v1150 = vmul.f32 %v1149, 1.442695
  %v1151 = vpow.pop %v1150
  %v1152 = vadd.f32 %v1151, 1.0
  %v1153 = vrcp.pop %v1152
  %v1154 = vmul.f32 1.0, %v1153
  %v1155 = vadd.f32 %v1100, %v853
  %1157 = vrot.lane.b32.xlu0 %v1143, 64
  %v1158 = vpop.permute.xlu0 %1157
  %v1160 = vmul.f32 %v1154, %v1158
  %1162 = vrot.lane.b32.xlu0 %v1160, 64
  %v1163 = vpop.permute.xlu0 %1162
  %v1165 = vadd.f32 %v1155, %v1163
  %v1166 = vtanh.pop %v1165
  %v1167 = vsub.f32 1.0, %v1154
  %1169 = vrot.lane.b32.xlu0 %v1166, 96
  %v1170 = vpop.permute.xlu0 %1169
  %v1172 = vmul.f32 %v1167, %v1170
  %v1173 = vmul.f32 %v1154, %v1099
  %v1174 = vadd.f32 %v1172, %v1173
  %v1175 = vld [vmem:[#allocation3 + $0x14] sm:$0xf]
  %v1176 = vpack.c.bf16 %v1174, %v1174
  %1178 = vrot.lane.b32.xlu0 %v1176, 96
  %v1179 = vpop.permute.xlu0 %1178
  %v1181 = vsel %vm69, %v1179, 0
  %1183 = vmatprep.subr.bf16.mxu0 0
  %1184 = vmatpush1.bf16.msra.mxu0 %v801
  %1185 = vmatprep.subr.bf16.mxu0 0
  %1186 = vmatpush1.bf16.msra.mxu0 %v802
  %1187 = vmatprep.subr.bf16.mxu0 0
  %1188 = vmatpush1.bf16.msra.mxu0 0
  %1189 = vmatprep.subr.bf16.mxu0 0
  %1190 = vmatpush1.bf16.msra.mxu0 0
  %1191 = vmatprep.subr.bf16.mxu0 0
  %1192 = vmatpush1.bf16.msra.mxu0 0
  %1193 = vmatprep.subr.bf16.mxu0 0
  %1194 = vmatpush1.bf16.msra.mxu0 0
  %1195 = vmatprep.subr.bf16.mxu0 0
  %1196 = vmatpush1.bf16.msra.mxu0 0
  %1197 = vmatprep.subr.bf16.mxu0 0
  %1198 = vmatpush1.bf16.msra.mxu0 0
  %1199 = vmatprep.subr.bf16.mxu0 0
  %1200 = vmatpush1.bf16.msra.mxu0 0
  %1201 = vmatprep.subr.bf16.mxu0 0
  %1202 = vmatpush1.bf16.msra.mxu0 0
  %1203 = vmatprep.subr.bf16.mxu0 0
  %1204 = vmatpush1.bf16.msra.mxu0 0
  %1205 = vmatprep.subr.bf16.mxu0 0
  %1206 = vmatpush1.bf16.msra.mxu0 0
  %1207 = vmatprep.subr.bf16.mxu0 0
  %1208 = vmatpush1.bf16.msra.mxu0 0
  %1209 = vmatprep.subr.bf16.mxu0 0
  %1210 = vmatpush1.bf16.msra.mxu0 0
  %1211 = vmatprep.subr.bf16.mxu0 0
  %1212 = vmatpush1.bf16.msra.mxu0 0
  %1213 = vmatprep.subr.bf16.mxu0 0
  %1214 = vmatpush1.bf16.msra.mxu0 0
  %1215 = vmatprep.mubr.bf16.mxu0 0
  %1216 = vmatmul.mubr.bf16.gmra.mrb[0].mxu0 %v1181
  %v1217 = vpop.f32.mrb[0].mxu0
  %v1218 = vadd.f32 %v784, %v1217
  %v1219 = vpop.f32.mrb[0].mxu0
  %v1220 = vpop.f32.mrb[0].mxu0
  %v1221 = vpop.f32.mrb[0].mxu0
  %1222 = vdwg.mxu0
  %v1223 = vadd.f32 %v1175, %v1218
  %v1224 = vxor.u32 %v1223, 2147483648
  %v1225 = vmul.f32 %v1224, 1.442695
  %v1226 = vpow.pop %v1225
  %v1227 = vadd.f32 %v1226, 1.0
  %v1228 = vrcp.pop %v1227
  %v1229 = vmul.f32 1.0, %v1228
  %v1230 = vadd.f32 %v1175, %v853
  %1232 = vrot.lane.b32.xlu0 %v1218, 64
  %v1233 = vpop.permute.xlu0 %1232
  %v1235 = vmul.f32 %v1229, %v1233
  %1237 = vrot.lane.b32.xlu0 %v1235, 64
  %v1238 = vpop.permute.xlu0 %1237
  %v1240 = vadd.f32 %v1230, %v1238
  %v1241 = vtanh.pop %v1240
  %v1242 = vsub.f32 1.0, %v1229
  %1244 = vrot.lane.b32.xlu0 %v1241, 96
  %v1245 = vpop.permute.xlu0 %1244
  %v1247 = vmul.f32 %v1242, %v1245
  %v1248 = vmul.f32 %v1229, %v1174
  %v1249 = vadd.f32 %v1247, %v1248
  %v1250 = vld [vmem:[#allocation3 + $0x18] sm:$0xf]
  %v1251 = vpack.c.bf16 %v1249, %v1249
  %1253 = vrot.lane.b32.xlu0 %v1251, 96
  %v1254 = vpop.permute.xlu0 %1253
  %v1256 = vsel %vm69, %v1254, 0
  %1258 = vmatprep.subr.bf16.mxu0 0
  %1259 = vmatpush1.bf16.msra.mxu0 %v801
  %1260 = vmatprep.subr.bf16.mxu0 0
  %1261 = vmatpush1.bf16.msra.mxu0 %v802
  %1262 = vmatprep.subr.bf16.mxu0 0
  %1263 = vmatpush1.bf16.msra.mxu0 0
  %1264 = vmatprep.subr.bf16.mxu0 0
  %1265 = vmatpush1.bf16.msra.mxu0 0
  %1266 = vmatprep.subr.bf16.mxu0 0
  %1267 = vmatpush1.bf16.msra.mxu0 0
  %1268 = vmatprep.subr.bf16.mxu0 0
  %1269 = vmatpush1.bf16.msra.mxu0 0
  %1270 = vmatprep.subr.bf16.mxu0 0
  %1271 = vmatpush1.bf16.msra.mxu0 0
  %1272 = vmatprep.subr.bf16.mxu0 0
  %1273 = vmatpush1.bf16.msra.mxu0 0
  %1274 = vmatprep.subr.bf16.mxu0 0
  %1275 = vmatpush1.bf16.msra.mxu0 0
  %1276 = vmatprep.subr.bf16.mxu0 0
  %1277 = vmatpush1.bf16.msra.mxu0 0
  %1278 = vmatprep.subr.bf16.mxu0 0
  %1279 = vmatpush1.bf16.msra.mxu0 0
  %1280 = vmatprep.subr.bf16.mxu0 0
  %1281 = vmatpush1.bf16.msra.mxu0 0
  %1282 = vmatprep.subr.bf16.mxu0 0
  %1283 = vmatpush1.bf16.msra.mxu0 0
  %1284 = vmatprep.subr.bf16.mxu0 0
  %1285 = vmatpush1.bf16.msra.mxu0 0
  %1286 = vmatprep.subr.bf16.mxu0 0
  %1287 = vmatpush1.bf16.msra.mxu0 0
  %1288 = vmatprep.subr.bf16.mxu0 0
  %1289 = vmatpush1.bf16.msra.mxu0 0
  %1290 = vmatprep.mubr.bf16.mxu0 0
  %1291 = vmatmul.mubr.bf16.gmra.mrb[0].mxu0 %v1256
  %v1292 = vpop.f32.mrb[0].mxu0
  %v1293 = vadd.f32 %v784, %v1292
  %v1294 = vpop.f32.mrb[0].mxu0
  %v1295 = vpop.f32.mrb[0].mxu0
  %v1296 = vpop.f32.mrb[0].mxu0
  %1297 = vdwg.mxu0
  %v1298 = vadd.f32 %v1250, %v1293
  %v1299 = vxor.u32 %v1298, 2147483648
  %v1300 = vmul.f32 %v1299, 1.442695
  %v1301 = vpow.pop %v1300
  %v1302 = vadd.f32 %v1301, 1.0
  %v1303 = vrcp.pop %v1302
  %v1304 = vmul.f32 1.0, %v1303
  %v1305 = vadd.f32 %v1250, %v853
  %1307 = vrot.lane.b32.xlu0 %v1293, 64
  %v1308 = vpop.permute.xlu0 %1307
  %v1310 = vmul.f32 %v1304, %v1308
  %1312 = vrot.lane.b32.xlu0 %v1310, 64
  %v1313 = vpop.permute.xlu0 %1312
  %v1315 = vadd.f32 %v1305, %v1313
  %v1316 = vtanh.pop %v1315
  %v1317 = vsub.f32 1.0, %v1304
  %1319 = vrot.lane.b32.xlu0 %v1316, 96
  %v1320 = vpop.permute.xlu0 %1319
  %v1322 = vmul.f32 %v1317, %v1320
  %v1323 = vmul.f32 %v1304, %v1249
  %v1324 = vadd.f32 %v1322, %v1323
  %v1325 = vld [vmem:[#allocation3 + $0x1c] sm:$0xf]
  %v1326 = vpack.c.bf16 %v1324, %v1324
  %1328 = vrot.lane.b32.xlu0 %v1326, 96
  %v1329 = vpop.permute.xlu0 %1328
  %v1331 = vsel %vm69, %v1329, 0
  %1333 = vmatprep.subr.bf16.mxu0 0
  %1334 = vmatpush1.bf16.msra.mxu0 %v801
  %1335 = vmatprep.subr.bf16.mxu0 0
  %1336 = vmatpush1.bf16.msra.mxu0 %v802
  %1337 = vmatprep.subr.bf16.mxu0 0
  %1338 = vmatpush1.bf16.msra.mxu0 0
  %1339 = vmatprep.subr.bf16.mxu0 0
  %1340 = vmatpush1.bf16.msra.mxu0 0
  %1341 = vmatprep.subr.bf16.mxu0 0
  %1342 = vmatpush1.bf16.msra.mxu0 0
  %1343 = vmatprep.subr.bf16.mxu0 0
  %1344 = vmatpush1.bf16.msra.mxu0 0
  %1345 = vmatprep.subr.bf16.mxu0 0
  %1346 = vmatpush1.bf16.msra.mxu0 0
  %1347 = vmatprep.subr.bf16.mxu0 0
  %1348 = vmatpush1.bf16.msra.mxu0 0
  %1349 = vmatprep.subr.bf16.mxu0 0
  %1350 = vmatpush1.bf16.msra.mxu0 0
  %1351 = vmatprep.subr.bf16.mxu0 0
  %1352 = vmatpush1.bf16.msra.mxu0 0
  %1353 = vmatprep.subr.bf16.mxu0 0
  %1354 = vmatpush1.bf16.msra.mxu0 0
  %1355 = vmatprep.subr.bf16.mxu0 0
  %1356 = vmatpush1.bf16.msra.mxu0 0
  %1357 = vmatprep.subr.bf16.mxu0 0
  %1358 = vmatpush1.bf16.msra.mxu0 0
  %1359 = vmatprep.subr.bf16.mxu0 0
  %1360 = vmatpush1.bf16.msra.mxu0 0
  %1361 = vmatprep.subr.bf16.mxu0 0
  %1362 = vmatpush1.bf16.msra.mxu0 0
  %1363 = vmatprep.subr.bf16.mxu0 0
  %1364 = vmatpush1.bf16.msra.mxu0 0
  %1365 = vmatprep.mubr.bf16.mxu0 0
  %1366 = vmatmul.mubr.bf16.gmra.mrb[0].mxu0 %v1331
  %v1367 = vpop.f32.mrb[0].mxu0
  %v1368 = vadd.f32 %v784, %v1367
  %v1369 = vpop.f32.mrb[0].mxu0
  %v1370 = vpop.f32.mrb[0].mxu0
  %v1371 = vpop.f32.mrb[0].mxu0
  %1372 = vdwg.mxu0
  %v1373 = vadd.f32 %v1325, %v1368
  %v1374 = vxor.u32 %v1373, 2147483648
  %v1375 = vmul.f32 %v1374, 1.442695
  %v1376 = vpow.pop %v1375
  %v1377 = vadd.f32 %v1376, 1.0
  %v1378 = vrcp.pop %v1377
  %v1379 = vmul.f32 1.0, %v1378
  %v1380 = vadd.f32 %v1325, %v853
  %1382 = vrot.lane.b32.xlu0 %v1368, 64
  %v1383 = vpop.permute.xlu0 %1382
  %v1385 = vmul.f32 %v1379, %v1383
  %1387 = vrot.lane.b32.xlu0 %v1385, 64
  %v1388 = vpop.permute.xlu0 %1387
  %v1390 = vadd.f32 %v1380, %v1388
  %v1391 = vtanh.pop %v1390
  %v1392 = vsub.f32 1.0, %v1379
  %1394 = vrot.lane.b32.xlu0 %v1391, 96
  %v1395 = vpop.permute.xlu0 %1394
  %v1397 = vmul.f32 %v1392, %v1395
  %v1398 = vmul.f32 %v1379, %v1324
  %v1399 = vadd.f32 %v1397, %v1398
  %1401 = vrot.lane.b32.xlu0 %v689, 96
  %v1402 = vpop.permute.xlu0 %1401
  %vm1404 = vcmask 257024
  %v1405 = vsel %vm1404, %v1402, 0.0
  %1406 = vadd.xlane.f32.xlu0 %v1405
  %v1407 = vpop.xlane.xlu0 %1406
  %v1408 = vrcp.pop 32.0
  %v1409 = vmul.f32 %v1407, %v1408
  %v1410 = vsub.f32 %v689, %v1409
  %v1411 = vmul.f32 %v1410, %v1410
  %1413 = vrot.lane.b32.xlu0 %v1411, 96
  %v1414 = vpop.permute.xlu0 %1413
  %v1416 = vsel %vm1404, %v1414, 0.0
  %1417 = vadd.xlane.f32.xlu0 %v1416
  %v1418 = vpop.xlane.xlu0 %1417
  %v1419 = vmul.f32 %v1418, %v1408
  %v1420 = vadd.f32 %v1419, 1e-05
  %v1421 = vrsqrt.pop %v1420
  %v1422 = vmul.f32 %v1410, %v1421
  %v1423 = vld [vmem:[%s7] sm:$0x1]
  %v1425 = vlaneseq
  %v1426 = vshrl.u32 %v1425, 7
  %v1427 = vsub.s32 0, %v1426
  %v1428 = vrot.slane %v1423, %v1427
  %1429 = vrot.lane.b32.xlu0 %v1428, 32
  %v1430 = vpop.permute.xlu0 %1429
  %v1432 = vmul.f32 %v1422, %v1430
  %v1433 = vld [vmem:[%s9] sm:$0x1]
  %v1435 = vlaneseq
  %v1436 = vshrl.u32 %v1435, 7
  %v1437 = vsub.s32 0, %v1436
  %v1438 = vrot.slane %v1433, %v1437
  %1439 = vrot.lane.b32.xlu0 %v1438, 32
  %v1440 = vpop.permute.xlu0 %1439
  %v1442 = vadd.f32 %v1432, %v1440
  %1444 = vrot.lane.b32.xlu0 %v1399, 96
  %v1445 = vpop.permute.xlu0 %1444
  %v1447 = vsel %vm1404, %v1445, 0.0
  %1448 = vadd.xlane.f32.xlu0 %v1447
  %v1449 = vpop.xlane.xlu0 %1448
  %v1450 = vmul.f32 %v1449, %v1408
  %v1451 = vsub.f32 %v1399, %v1450
  %v1452 = vmul.f32 %v1451, %v1451
  %1454 = vrot.lane.b32.xlu0 %v1452, 96
  %v1455 = vpop.permute.xlu0 %1454
  %v1457 = vsel %vm1404, %v1455, 0.0
  %1458 = vadd.xlane.f32.xlu0 %v1457
  %v1459 = vpop.xlane.xlu0 %1458
  %v1460 = vmul.f32 %v1459, %v1408
  %v1461 = vadd.f32 %v1460, 1e-05
  %v1462 = vrsqrt.pop %v1461
  %v1463 = vmul.f32 %v1451, %v1462
  %v1464 = vld [vmem:[%s8] sm:$0x1]
  %v1466 = vlaneseq
  %v1467 = vshrl.u32 %v1466, 7
  %v1468 = vsub.s32 0, %v1467
  %v1469 = vrot.slane %v1464, %v1468
  %1470 = vrot.lane.b32.xlu0 %v1469, 32
  %v1471 = vpop.permute.xlu0 %1470
  %v1473 = vmul.f32 %v1463, %v1471
  %v1474 = vld [vmem:[%s10] sm:$0x1]
  %v1476 = vlaneseq
  %v1477 = vshrl.u32 %v1476, 7
  %v1478 = vsub.s32 0, %v1477
  %v1479 = vrot.slane %v1474, %v1478
  %1480 = vrot.lane.b32.xlu0 %v1479, 32
  %v1481 = vpop.permute.xlu0 %1480
  %v1483 = vadd.f32 %v1473, %v1481
  %1485 = vrot.lane.b32.xlu0 %v1442, 96
  %v1486 = vpop.permute.xlu0 %1485
  %v1488 = vsel %vm69, %v1486, %v1483
  %v1489 = vpack.c.bf16 %v1488, %v1488
  %v1490 = vld [vmem:[%s11] sm:$0xf]
  %v1491 = vld [vmem:[%s11 + $0x4] sm:$0xf]
  %v1492 = vld [vmem:[%s11 + $0x8] sm:$0xf]
  %v1493 = vld [vmem:[%s11 + $0xc] sm:$0xf]
  %v1494 = vld [vmem:[%s11 + $0x10] sm:$0xf]
  %v1495 = vld [vmem:[%s11 + $0x14] sm:$0xf]
  %v1496 = vld [vmem:[%s11 + $0x18] sm:$0xf]
  %v1497 = vld [vmem:[%s11 + $0x1c] sm:$0xf]
  %v1498 = vld [vmem:[%s12] sm:$0x1]
  %v1500 = vlaneseq
  %v1501 = vshrl.u32 %v1500, 7
  %v1502 = vsub.s32 0, %v1501
  %v1503 = vrot.slane %v1498, %v1502
  %v1513 = vunpack.c.l.b16 %v1490
  %v1514 = vunpack.c.l.b16 %v1491
  %v1515 = vunpack.c.l.b16 %v1492
  %v1516 = vunpack.c.l.b16 %v1493
  %v1517 = vunpack.c.l.b16 %v1494
  %v1518 = vunpack.c.l.b16 %v1495
  %v1519 = vunpack.c.l.b16 %v1496
  %v1520 = vunpack.c.l.b16 %v1497
  %v1521 = vpack.c.b16 %v1514, %v1513
  %v1522 = vpack.c.b16 %v1516, %v1515
  %v1523 = vpack.c.b16 %v1518, %v1517
  %v1524 = vpack.c.b16 %v1520, %v1519
  %vm1529 = vcmask 523264
  %v1531 = vsel %vm1529, %v1489, 0
  %1533 = vmatprep.subr.bf16.mxu0 0
  %1534 = vmatpush1.bf16.msra.mxu0 %v1521
  %1535 = vmatprep.subr.bf16.mxu0 0
  %1536 = vmatpush1.bf16.msra.mxu0 %v1522
  %1537 = vmatprep.subr.bf16.mxu0 0
  %1538 = vmatpush1.bf16.msra.mxu0 %v1523
  %1539 = vmatprep.subr.bf16.mxu0 0
  %1540 = vmatpush1.bf16.msra.mxu0 %v1524
  %1541 = vmatprep.subr.bf16.mxu0 0
  %1542 = vmatpush1.bf16.msra.mxu0 0
  %1543 = vmatprep.subr.bf16.mxu0 0
  %1544 = vmatpush1.bf16.msra.mxu0 0
  %1545 = vmatprep.subr.bf16.mxu0 0
  %1546 = vmatpush1.bf16.msra.mxu0 0
  %1547 = vmatprep.subr.bf16.mxu0 0
  %1548 = vmatpush1.bf16.msra.mxu0 0
  %1549 = vmatprep.subr.bf16.mxu0 0
  %1550 = vmatpush1.bf16.msra.mxu0 0
  %1551 = vmatprep.subr.bf16.mxu0 0
  %1552 = vmatpush1.bf16.msra.mxu0 0
  %1553 = vmatprep.subr.bf16.mxu0 0
  %1554 = vmatpush1.bf16.msra.mxu0 0
  %1555 = vmatprep.subr.bf16.mxu0 0
  %1556 = vmatpush1.bf16.msra.mxu0 0
  %1557 = vmatprep.subr.bf16.mxu0 0
  %1558 = vmatpush1.bf16.msra.mxu0 0
  %1559 = vmatprep.subr.bf16.mxu0 0
  %1560 = vmatpush1.bf16.msra.mxu0 0
  %1561 = vmatprep.subr.bf16.mxu0 0
  %1562 = vmatpush1.bf16.msra.mxu0 0
  %1563 = vmatprep.subr.bf16.mxu0 0
  %1564 = vmatpush1.bf16.msra.mxu0 0
  %1565 = vmatprep.mubr.bf16.mxu0 0
  %1566 = vmatmul.mubr.bf16.gmra.mrb[0].mxu0 %v1531
  %v1567 = vpop.f32.mrb[0].mxu0
  %v1568 = vadd.f32 %v1503, %v1567
  %v1569 = vpop.f32.mrb[0].mxu0
  %v1570 = vpop.f32.mrb[0].mxu0
  %v1571 = vpop.f32.mrb[0].mxu0
  %1572 = vdwg.mxu0
  %1573 = vst [vmem:[%s13] sm:$0xf] %v1568
  // Predicated region
  $region54: #{encoder_forward.1} parent=0 // pred_check
    _
  $region55: #{encoder_forward.1} parent=0 // pred_check_branch
    %1575 = sbr.rel (0) target = $region57
  $region56: #{encoder_forward.1} parent=0 // pred_region
    _
  $region57: #{encoder_forward.1} parent=0 // pred_fallthru
    _
  // Predicated region
  $region58: #{encoder_forward.1} parent=0 // pred_check
    _
  $region59: #{encoder_forward.1} parent=0 // pred_check_branch
    %1577 = sbr.rel (0) target = $region61
  $region60: #{encoder_forward.1} parent=0 // pred_region
    _
  $region61: #{encoder_forward.1} parent=0 // pred_fallthru
    _

</llo_original>
